<compile_context>
chip_gen: v7x
topology: tpu7x:2x2x1
jax: 0.10.0
libtpu: 0.0.40
codegen_flags: <defaults>
</compile_context>

<pallas_src>
import functools

import jax
import jax.numpy as jnp
from jax.experimental import pallas as pl
from jax.experimental.pallas import tpu as pltpu


_SQRT1_2 = 0.7071067811865476


def _erf(x):
    # Abramowitz & Stegun 7.1.26 (max abs error ~1.5e-7): only mul/add/div/exp,
    # lowers cleanly inside Mosaic (exp goes to the EUP slot).
    a1, a2, a3, a4, a5 = 0.254829592, -0.284496736, 1.421413741, -1.453152027, 1.061405429
    p = 0.3275911
    ax = jnp.abs(x)
    t = 1.0 / (1.0 + p * ax)
    poly = ((((a5 * t + a4) * t + a3) * t + a2) * t + a1) * t
    y = 1.0 - poly * jnp.exp(-ax * ax)
    return jnp.where(x >= 0, y, -y)


def _gelu_exact(x):
    return 0.5 * x * (1.0 + _erf(x * _SQRT1_2))


def _layernorm_f32(x, g, b, eps):
    mu = jnp.mean(x, axis=-1, keepdims=True)
    xc = x - mu
    var = jnp.mean(xc * xc, axis=-1, keepdims=True)
    inv = jax.lax.rsqrt(var + eps)
    return xc * inv * g + b


def _pick_tile(dim, prefs=(512, 256, 128)):
    for t in prefs:
        if dim % t == 0:
            return t
    return dim


def _vmem_limit(block_bytes):
    # double-buffered pipeline blocks + headroom, clamped to [16 MiB, 64 MiB]
    need = 2 * block_bytes + (2 << 20)
    return int(min(max(need, 16 << 20), 64 << 20))


# ----------------------------- kernels ---------------------------------------


def ln_linear_kernel(x_ref, g_ref, b_ref, w_ref, bias_ref, o_ref, *, eps, activation):
    """o = [LayerNorm(x)] @ w + bias  [-> exact GELU]."""
    x = x_ref[...].astype(jnp.float32)
    h = _layernorm_f32(x, g_ref[...].astype(jnp.float32),
                       b_ref[...].astype(jnp.float32), eps)
    acc = jnp.dot(h.astype(w_ref.dtype), w_ref[...],
                  preferred_element_type=jnp.float32)
    acc = acc + bias_ref[...].astype(jnp.float32)
    if activation == "gelu":
        acc = _gelu_exact(acc)
    o_ref[...] = acc.astype(o_ref.dtype)


def linear_residual_kernel(x_ref, w_ref, bias_ref, r_ref, o_ref):
    """o = x @ w + bias + residual."""
    acc = jnp.dot(x_ref[...], w_ref[...], preferred_element_type=jnp.float32)
    acc = acc + bias_ref[...].astype(jnp.float32) + r_ref[...].astype(jnp.float32)
    o_ref[...] = acc.astype(o_ref.dtype)


def attention_kernel(qkv_ref, o_ref, *, num_heads, scale):
    """Per-batch multi-head attention straight from the (N, 3D) qkv slab.

    qkv column layout is (qkv, head, d) — exactly what the qkv Linear produced —
    so the head split/merge rearranges stay inside VMEM.
    """
    D = o_ref.shape[-1]
    d = D // num_heads
    outs = []
    for h in range(num_heads):                      # static unrolled head loop
        q = qkv_ref[0, :, h * d:(h + 1) * d].astype(jnp.float32)            # (N, d)
        k = qkv_ref[0, :, D + h * d:D + (h + 1) * d].astype(jnp.float32)    # (N, d)
        v = qkv_ref[0, :, 2 * D + h * d:2 * D + (h + 1) * d].astype(jnp.float32)
        s = jnp.dot(q, k.T, preferred_element_type=jnp.float32) * scale     # (N, N)
        s = s - jnp.max(s, axis=-1, keepdims=True)
        p = jnp.exp(s)
        p = p / jnp.sum(p, axis=-1, keepdims=True)
        outs.append(jnp.dot(p, v, preferred_element_type=jnp.float32))      # (N, d)
    # single lane-dense store of the merged-head result
    o_ref[0] = jnp.concatenate(outs, axis=-1).astype(o_ref.dtype)


# ----------------------------- wrappers ---------------------------------------


def ln_linear(x, g, b, w, bias, *, eps=1e-6, activation=None):
    """y = LayerNorm(x) @ w + bias [-> GELU].  x:(M,K) w:(K,N) bias:(N,)."""
    M, K = x.shape
    Kw, Nout = w.shape
    assert K == Kw
    TM = _pick_tile(M)
    TN = _pick_tile(Nout)
    itm = jnp.dtype(x.dtype).itemsize
    blk_bytes = (TM * K + 2 * K + K * TN + TN + TM * TN) * itm
    cost = pl.CostEstimate(
        flops=2 * M * K * Nout,
        transcendentals=M * Nout if activation == "gelu" else 0,
        bytes_accessed=(M * K + 2 * K + K * Nout + Nout + M * Nout) * itm,
    )
    return pl.pallas_call(
        functools.partial(ln_linear_kernel, eps=eps, activation=activation),
        out_shape=jax.ShapeDtypeStruct((M, Nout), x.dtype),
        grid=(M // TM, Nout // TN),
        in_specs=[
            pl.BlockSpec((TM, K), lambda i, j: (i, 0)),
            pl.BlockSpec((1, K), lambda i, j: (0, 0)),
            pl.BlockSpec((1, K), lambda i, j: (0, 0)),
            pl.BlockSpec((K, TN), lambda i, j: (0, j)),
            pl.BlockSpec((1, TN), lambda i, j: (0, j)),
        ],
        out_specs=pl.BlockSpec((TM, TN), lambda i, j: (i, j)),
        compiler_params=pltpu.CompilerParams(
            dimension_semantics=("parallel", "parallel"),
            vmem_limit_bytes=_vmem_limit(blk_bytes)),
        cost_estimate=cost,
    )(x, g.reshape(1, K), b.reshape(1, K), w, bias.reshape(1, Nout))


def linear_residual(x, w, bias, residual):
    """y = x @ w + bias + residual.  x:(M,K) w:(K,N) residual:(M,N)."""
    M, K = x.shape
    Kw, Nout = w.shape
    assert K == Kw
    TM = _pick_tile(M)
    TN = _pick_tile(Nout)
    itm = jnp.dtype(x.dtype).itemsize
    blk_bytes = (TM * K + K * TN + TN + 2 * TM * TN) * itm
    cost = pl.CostEstimate(
        flops=2 * M * K * Nout,
        transcendentals=0,
        bytes_accessed=(M * K + K * Nout + Nout + 2 * M * Nout) * itm,
    )
    return pl.pallas_call(
        linear_residual_kernel,
        out_shape=jax.ShapeDtypeStruct((M, Nout), x.dtype),
        grid=(M // TM, Nout // TN),
        in_specs=[
            pl.BlockSpec((TM, K), lambda i, j: (i, 0)),
            pl.BlockSpec((K, TN), lambda i, j: (0, j)),
            pl.BlockSpec((1, TN), lambda i, j: (0, j)),
            pl.BlockSpec((TM, TN), lambda i, j: (i, j)),
        ],
        out_specs=pl.BlockSpec((TM, TN), lambda i, j: (i, j)),
        compiler_params=pltpu.CompilerParams(
            dimension_semantics=("parallel", "parallel"),
            vmem_limit_bytes=_vmem_limit(blk_bytes)),
        cost_estimate=cost,
    )(x, w, bias.reshape(1, Nout), residual)


def attention(qkv, num_heads, scale):
    """qkv: (B, N, 3D) with column layout (qkv, head, d) -> merged-head (B, N, D)."""
    B, N, threeD = qkv.shape
    D = threeD // 3
    d = D // num_heads
    itm = jnp.dtype(qkv.dtype).itemsize
    blk_bytes = (N * threeD + N * D) * itm
    cost = pl.CostEstimate(
        flops=4 * B * num_heads * N * N * d,
        transcendentals=B * num_heads * N * N,
        bytes_accessed=(B * N * threeD + B * N * D) * itm,
    )
    return pl.pallas_call(
        functools.partial(attention_kernel, num_heads=num_heads, scale=scale),
        out_shape=jax.ShapeDtypeStruct((B, N, D), qkv.dtype),
        grid=(B,),
        in_specs=[pl.BlockSpec((1, N, threeD), lambda b: (b, 0, 0))],
        out_specs=pl.BlockSpec((1, N, D), lambda b: (b, 0, 0)),
        compiler_params=pltpu.CompilerParams(
            dimension_semantics=("parallel",),
            vmem_limit_bytes=_vmem_limit(blk_bytes)),
        cost_estimate=cost,
    )(qkv)


def block_forward(x, p, num_heads, eps=1e-6):
    """ViT Block forward. x: (B, N, D); weights in PyTorch Linear layout (out, in)."""
    B, N, D = x.shape
    H = num_heads
    d = D // H
    scale = d ** -0.5
    M = B * N
    x2 = x.reshape(M, D)

    # Glue: transpose the (small) weights once to (in, out).
    w_qkv = p["w_qkv"].T        # (D, 3D), columns ordered (qkv, head, d)
    w_proj = p["w_proj"].T      # (D, D)
    w_fc1 = p["w_fc1"].T        # (D, Hid)
    w_fc2 = p["w_fc2"].T        # (Hid, D)
    b_qkv = jnp.zeros((3 * D,), x.dtype)   # qkv_bias=False in the module

    qkv = ln_linear(x2, p["ln1_g"], p["ln1_b"], w_qkv, b_qkv, eps=eps)       # norm1 + qkv
    av = attention(qkv.reshape(B, N, 3 * D), H, scale)                       # all heads, merged out
    x_res = linear_residual(av.reshape(M, D), w_proj, p["b_proj"], x2)       # proj + add1
    hid = ln_linear(x_res, p["ln2_g"], p["ln2_b"], w_fc1, p["b_fc1"],
                    eps=eps, activation="gelu")                              # norm2 + fc1 + GELU
    out = linear_residual(hid, w_fc2, p["b_fc2"], x_res)                     # fc2 + add2
    return out.reshape(B, N, D)

# TODO(synk): dropout (p=0 -> identity), save_*/register_hook bookkeeping, keeptoken /
# ext_* override branches and relprop are host-side / LRP-only and are intentionally
# not part of the forward kernels.


# ----------------------------- reference & test --------------------------------


def ref_block(x, p, num_heads, eps=1e-6):
    B, N, D = x.shape
    H = num_heads
    d = D // H
    scale = d ** -0.5
    hp = jax.lax.Precision.HIGHEST

    def ln(z, g, b):
        mu = jnp.mean(z, axis=-1, keepdims=True)
        var = jnp.mean((z - mu) ** 2, axis=-1, keepdims=True)
        return (z - mu) / jnp.sqrt(var + eps) * g + b

    h1 = ln(x, p["ln1_g"], p["ln1_b"])
    qkv = jnp.einsum("bnd,ed->bne", h1, p["w_qkv"], precision=hp)
    qkv = qkv.reshape(B, N, 3, H, d).transpose(2, 0, 3, 1, 4)
    q, k, v = qkv[0], qkv[1], qkv[2]
    dots = jnp.einsum("bhid,bhjd->bhij", q, k, precision=hp) * scale
    attn = jax.nn.softmax(dots, axis=-1)
    o = jnp.einsum("bhij,bhjd->bhid", attn, v, precision=hp)
    o = o.transpose(0, 2, 1, 3).reshape(B, N, D)
    av = jnp.einsum("bnd,ed->bne", o, p["w_proj"], precision=hp) + p["b_proj"]
    x = x + av
    h2 = ln(x, p["ln2_g"], p["ln2_b"])
    y = jnp.einsum("bnd,ed->bne", h2, p["w_fc1"], precision=hp) + p["b_fc1"]
    y = jax.nn.gelu(y, approximate=False)
    y = jnp.einsum("bnh,eh->bne", y, p["w_fc2"], precision=hp) + p["b_fc2"]
    return x + y


if __name__ == "__main__":
    # Small shapes consistent with the module: batch=2, seq=8, dim=32, heads=4, mlp=4x.
    B, N, D, H = 2, 8, 32, 4
    hidden = 4 * D

    key = jax.random.PRNGKey(0)
    ks = jax.random.split(key, 12)
    p = {
        "ln1_g": 1.0 + 0.1 * jax.random.normal(ks[0], (D,), jnp.float32),
        "ln1_b": 0.1 * jax.random.normal(ks[1], (D,), jnp.float32),
        "ln2_g": 1.0 + 0.1 * jax.random.normal(ks[2], (D,), jnp.float32),
        "ln2_b": 0.1 * jax.random.normal(ks[3], (D,), jnp.float32),
        "w_qkv": 0.05 * jax.random.normal(ks[4], (3 * D, D), jnp.float32),
        "w_proj": 0.05 * jax.random.normal(ks[5], (D, D), jnp.float32),
        "b_proj": 0.05 * jax.random.normal(ks[6], (D,), jnp.float32),
        "w_fc1": 0.05 * jax.random.normal(ks[7], (hidden, D), jnp.float32),
        "b_fc1": 0.05 * jax.random.normal(ks[8], (hidden,), jnp.float32),
        "w_fc2": 0.05 * jax.random.normal(ks[9], (D, hidden), jnp.float32),
        "b_fc2": 0.05 * jax.random.normal(ks[10], (D,), jnp.float32),
    }
    x = jax.random.normal(ks[11], (B, N, D), jnp.float32)

    fwd = jax.jit(functools.partial(block_forward, num_heads=H))
    out = jax.block_until_ready(fwd(x, p))

    ref = ref_block(x, p, num_heads=H)
    assert out.shape == (B, N, D)
    max_err = float(jnp.max(jnp.abs(out - ref)))
    assert jnp.allclose(out, ref, atol=2e-3, rtol=2e-3), f"max abs err {max_err}"
    print("KERNEL_OK")
</pallas_src>

<mosaic_0001>
module attributes {stable_mosaic.version = 11 : i64} {
  func.func @ln_linear_kernel(%arg0: i32, %arg1: i32, %arg2: memref<16x32xf32, #tpu.memory_space<vmem>>, %arg3: memref<1x32xf32, #tpu.memory_space<vmem>>, %arg4: memref<1x32xf32, #tpu.memory_space<vmem>>, %arg5: memref<32x96xf32, #tpu.memory_space<vmem>>, %arg6: memref<1x96xf32, #tpu.memory_space<vmem>>, %arg7: memref<16x96xf32, #tpu.memory_space<vmem>>) attributes {dimension_semantics = [#tpu.dimension_semantics<parallel>, #tpu.dimension_semantics<parallel>], iteration_bounds = array<i64: 1, 1>, scalar_prefetch = 0 : i64, scratch_operands = 0 : i64, tpu.core_type = #tpu.core_type<tc>, window_params = [{transform_indices = @transform_0, window_bounds = array<i64: 16, 32>}, {pipeline_mode = #tpu.pipeline_mode<synchronous>, transform_indices = @transform_1, window_bounds = array<i64: 1, 32>}, {pipeline_mode = #tpu.pipeline_mode<synchronous>, transform_indices = @transform_2, window_bounds = array<i64: 1, 32>}, {transform_indices = @transform_3, window_bounds = array<i64: 32, 96>}, {transform_indices = @transform_4, window_bounds = array<i64: 1, 96>}, {transform_indices = @transform_5, window_bounds = array<i64: 16, 96>}]} {
    %c0 = arith.constant 0 : index
    %c0_0 = arith.constant 0 : index
    %0 = vector.load %arg2[%c0, %c0_0] : memref<16x32xf32, #tpu.memory_space<vmem>>, vector<16x32xf32>
    %c0_1 = arith.constant 0 : index
    %c0_2 = arith.constant 0 : index
    %1 = vector.load %arg3[%c0_1, %c0_2] : memref<1x32xf32, #tpu.memory_space<vmem>>, vector<1x32xf32>
    %c0_3 = arith.constant 0 : index
    %c0_4 = arith.constant 0 : index
    %2 = vector.load %arg4[%c0_3, %c0_4] : memref<1x32xf32, #tpu.memory_space<vmem>>, vector<1x32xf32>
    %cst = arith.constant dense<0.000000e+00> : vector<16xf32>
    %3 = vector.multi_reduction <add>, %0, %cst [1] : vector<16x32xf32> to vector<16xf32>
    %4 = vector.shape_cast %3 : vector<16xf32> to vector<16x1xf32>
    %cst_5 = arith.constant 3.200000e+01 : f32
    %5 = vector.broadcast %cst_5 : f32 to vector<16x1xf32>
    %6 = arith.divf %4, %5 : vector<16x1xf32>
    %7 = vector.broadcast %6 : vector<16x1xf32> to vector<16x32xf32>
    %8 = arith.subf %0, %7 : vector<16x32xf32>
    %9 = arith.mulf %8, %8 : vector<16x32xf32>
    %cst_6 = arith.constant dense<0.000000e+00> : vector<16xf32>
    %10 = vector.multi_reduction <add>, %9, %cst_6 [1] : vector<16x32xf32> to vector<16xf32>
    %11 = vector.shape_cast %10 : vector<16xf32> to vector<16x1xf32>
    %cst_7 = arith.constant 3.200000e+01 : f32
    %12 = vector.broadcast %cst_7 : f32 to vector<16x1xf32>
    %13 = arith.divf %11, %12 : vector<16x1xf32>
    %cst_8 = arith.constant 9.99999997E-7 : f32
    %14 = vector.broadcast %cst_8 : f32 to vector<16x1xf32>
    %15 = arith.addf %13, %14 : vector<16x1xf32>
    %16 = math.rsqrt %15 : vector<16x1xf32>
    %17 = vector.broadcast %16 : vector<16x1xf32> to vector<16x32xf32>
    %18 = arith.mulf %8, %17 : vector<16x32xf32>
    %19 = vector.broadcast %1 : vector<1x32xf32> to vector<16x32xf32>
    %20 = arith.mulf %18, %19 : vector<16x32xf32>
    %21 = vector.broadcast %2 : vector<1x32xf32> to vector<16x32xf32>
    %22 = arith.addf %20, %21 : vector<16x32xf32>
    %c0_9 = arith.constant 0 : index
    %c0_10 = arith.constant 0 : index
    %23 = vector.load %arg5[%c0_9, %c0_10] : memref<32x96xf32, #tpu.memory_space<vmem>>, vector<32x96xf32>
    %cst_11 = arith.constant dense<0.000000e+00> : vector<16x96xf32>
    %24 = tpu.matmul %22, %23, %cst_11 {dimension_numbers = #tpu.dot_dimension_numbers<[1], [0], [0], [1], [0, 0, 1, 1], [], []>} : vector<16x32xf32>, vector<32x96xf32>, vector<16x96xf32> -> vector<16x96xf32>
    %c0_12 = arith.constant 0 : index
    %c0_13 = arith.constant 0 : index
    %25 = vector.load %arg6[%c0_12, %c0_13] : memref<1x96xf32, #tpu.memory_space<vmem>>, vector<1x96xf32>
    %26 = vector.broadcast %25 : vector<1x96xf32> to vector<16x96xf32>
    %27 = arith.addf %24, %26 : vector<16x96xf32>
    %c0_14 = arith.constant 0 : index
    %c0_15 = arith.constant 0 : index
    %28 = vector.load %arg7[%c0_14, %c0_15] : memref<16x96xf32, #tpu.memory_space<vmem>>, vector<16x96xf32>
    tpu.vector_store %arg7[%c0_14, %c0_15], %27 {strides = array<i32>} : memref<16x96xf32, #tpu.memory_space<vmem>>, vector<16x96xf32>,
    return
  }
  func.func @transform_0(%arg0: i32, %arg1: i32) -> (i32, i32) {
    %c0_i32 = arith.constant 0 : i32
    %c0_i32_0 = arith.constant 0 : i32
    return %arg0, %c0_i32 : i32, i32
  }
  func.func @transform_1(%arg0: i32, %arg1: i32) -> (i32, i32) {
    %c0_i32 = arith.constant 0 : i32
    %c0_i32_0 = arith.constant 0 : i32
    %c0_i32_1 = arith.constant 0 : i32
    return %c0_i32, %c0_i32_0 : i32, i32
  }
  func.func @transform_2(%arg0: i32, %arg1: i32) -> (i32, i32) {
    %c0_i32 = arith.constant 0 : i32
    %c0_i32_0 = arith.constant 0 : i32
    %c0_i32_1 = arith.constant 0 : i32
    return %c0_i32, %c0_i32_0 : i32, i32
  }
  func.func @transform_3(%arg0: i32, %arg1: i32) -> (i32, i32) {
    %c0_i32 = arith.constant 0 : i32
    %c0_i32_0 = arith.constant 0 : i32
    return %c0_i32, %arg1 : i32, i32
  }
  func.func @transform_4(%arg0: i32, %arg1: i32) -> (i32, i32) {
    %c0_i32 = arith.constant 0 : i32
    %c0_i32_0 = arith.constant 0 : i32
    return %c0_i32, %arg1 : i32, i32
  }
  func.func @transform_5(%arg0: i32, %arg1: i32) -> (i32, i32) {
    %c0_i32 = arith.constant 0 : i32
    return %arg0, %arg1 : i32, i32
  }
}

module attributes {stable_mosaic.version = 11 : i64} {
  func.func @attention_kernel(%arg0: i32, %arg1: memref<1x8x96xf32, #tpu.memory_space<vmem>>, %arg2: memref<1x8x32xf32, #tpu.memory_space<vmem>>) attributes {dimension_semantics = [#tpu.dimension_semantics<parallel>], iteration_bounds = array<i64: 2>, scalar_prefetch = 0 : i64, scratch_operands = 0 : i64, tpu.core_type = #tpu.core_type<tc>, window_params = [{transform_indices = @transform_0, window_bounds = array<i64: 1, 8, 96>}, {transform_indices = @transform_1, window_bounds = array<i64: 1, 8, 32>}]} {
    %c0 = arith.constant 0 : index
    %c0_0 = arith.constant 0 : index
    %c0_1 = arith.constant 0 : index
    %0 = vector.load %arg1[%c0, %c0_0, %c0_1] : memref<1x8x96xf32, #tpu.memory_space<vmem>>, vector<1x8x8xf32>
    %1 = vector.shape_cast %0 : vector<1x8x8xf32> to vector<8x8xf32>
    %c0_2 = arith.constant 0 : index
    %c0_3 = arith.constant 0 : index
    %c32 = arith.constant 32 : index
    %2 = vector.load %arg1[%c0_2, %c0_3, %c32] : memref<1x8x96xf32, #tpu.memory_space<vmem>>, vector<1x8x8xf32>
    %3 = vector.shape_cast %2 : vector<1x8x8xf32> to vector<8x8xf32>
    %c0_4 = arith.constant 0 : index
    %c0_5 = arith.constant 0 : index
    %c64 = arith.constant 64 : index
    %4 = vector.load %arg1[%c0_4, %c0_5, %c64] : memref<1x8x96xf32, #tpu.memory_space<vmem>>, vector<1x8x8xf32>
    %5 = vector.shape_cast %4 : vector<1x8x8xf32> to vector<8x8xf32>
    %6 = tpu.transpose %3, [1, 0] : vector<8x8xf32> -> vector<8x8xf32>
    %cst = arith.constant dense<0.000000e+00> : vector<8x8xf32>
    %7 = tpu.matmul %1, %6, %cst {dimension_numbers = #tpu.dot_dimension_numbers<[1], [0], [0], [1], [0, 0, 1, 1], [], []>} : vector<8x8xf32>, vector<8x8xf32>, vector<8x8xf32> -> vector<8x8xf32>
    %cst_6 = arith.constant 0.353553385 : f32
    %8 = vector.broadcast %cst_6 : f32 to vector<8x8xf32>
    %9 = arith.mulf %7, %8 : vector<8x8xf32>
    %cst_7 = arith.constant dense<0xFF800000> : vector<8xf32>
    %10 = vector.multi_reduction <maximumf>, %9, %cst_7 [1] : vector<8x8xf32> to vector<8xf32>
    %11 = vector.shape_cast %10 : vector<8xf32> to vector<8x1xf32>
    %12 = vector.broadcast %11 : vector<8x1xf32> to vector<8x8xf32>
    %13 = arith.subf %9, %12 : vector<8x8xf32>
    %14 = math.exp %13 : vector<8x8xf32>
    %cst_8 = arith.constant dense<0.000000e+00> : vector<8xf32>
    %15 = vector.multi_reduction <add>, %14, %cst_8 [1] : vector<8x8xf32> to vector<8xf32>
    %16 = vector.shape_cast %15 : vector<8xf32> to vector<8x1xf32>
    %17 = vector.broadcast %16 : vector<8x1xf32> to vector<8x8xf32>
    %18 = arith.divf %14, %17 : vector<8x8xf32>
    %cst_9 = arith.constant dense<0.000000e+00> : vector<8x8xf32>
    %19 = tpu.matmul %18, %5, %cst_9 {dimension_numbers = #tpu.dot_dimension_numbers<[1], [0], [0], [1], [0, 0, 1, 1], [], []>} : vector<8x8xf32>, vector<8x8xf32>, vector<8x8xf32> -> vector<8x8xf32>
    %c0_10 = arith.constant 0 : index
    %c0_11 = arith.constant 0 : index
    %c8 = arith.constant 8 : index
    %20 = vector.load %arg1[%c0_10, %c0_11, %c8] : memref<1x8x96xf32, #tpu.memory_space<vmem>>, vector<1x8x8xf32>
    %21 = vector.shape_cast %20 : vector<1x8x8xf32> to vector<8x8xf32>
    %c0_12 = arith.constant 0 : index
    %c0_13 = arith.constant 0 : index
    %c40 = arith.constant 40 : index
    %22 = vector.load %arg1[%c0_12, %c0_13, %c40] : memref<1x8x96xf32, #tpu.memory_space<vmem>>, vector<1x8x8xf32>
    %23 = vector.shape_cast %22 : vector<1x8x8xf32> to vector<8x8xf32>
    %c0_14 = arith.constant 0 : index
    %c0_15 = arith.constant 0 : index
    %c72 = arith.constant 72 : index
    %24 = vector.load %arg1[%c0_14, %c0_15, %c72] : memref<1x8x96xf32, #tpu.memory_space<vmem>>, vector<1x8x8xf32>
    %25 = vector.shape_cast %24 : vector<1x8x8xf32> to vector<8x8xf32>
    %26 = tpu.transpose %23, [1, 0] : vector<8x8xf32> -> vector<8x8xf32>
    %cst_16 = arith.constant dense<0.000000e+00> : vector<8x8xf32>
    %27 = tpu.matmul %21, %26, %cst_16 {dimension_numbers = #tpu.dot_dimension_numbers<[1], [0], [0], [1], [0, 0, 1, 1], [], []>} : vector<8x8xf32>, vector<8x8xf32>, vector<8x8xf32> -> vector<8x8xf32>
    %cst_17 = arith.constant 0.353553385 : f32
    %28 = vector.broadcast %cst_17 : f32 to vector<8x8xf32>
    %29 = arith.mulf %27, %28 : vector<8x8xf32>
    %cst_18 = arith.constant dense<0xFF800000> : vector<8xf32>
    %30 = vector.multi_reduction <maximumf>, %29, %cst_18 [1] : vector<8x8xf32> to vector<8xf32>
    %31 = vector.shape_cast %30 : vector<8xf32> to vector<8x1xf32>
    %32 = vector.broadcast %31 : vector<8x1xf32> to vector<8x8xf32>
    %33 = arith.subf %29, %32 : vector<8x8xf32>
    %34 = math.exp %33 : vector<8x8xf32>
    %cst_19 = arith.constant dense<0.000000e+00> : vector<8xf32>
    %35 = vector.multi_reduction <add>, %34, %cst_19 [1] : vector<8x8xf32> to vector<8xf32>
    %36 = vector.shape_cast %35 : vector<8xf32> to vector<8x1xf32>
    %37 = vector.broadcast %36 : vector<8x1xf32> to vector<8x8xf32>
    %38 = arith.divf %34, %37 : vector<8x8xf32>
    %cst_20 = arith.constant dense<0.000000e+00> : vector<8x8xf32>
    %39 = tpu.matmul %38, %25, %cst_20 {dimension_numbers = #tpu.dot_dimension_numbers<[1], [0], [0], [1], [0, 0, 1, 1], [], []>} : vector<8x8xf32>, vector<8x8xf32>, vector<8x8xf32> -> vector<8x8xf32>
    %c0_21 = arith.constant 0 : index
    %c0_22 = arith.constant 0 : index
    %c16 = arith.constant 16 : index
    %40 = vector.load %arg1[%c0_21, %c0_22, %c16] : memref<1x8x96xf32, #tpu.memory_space<vmem>>, vector<1x8x8xf32>
    %41 = vector.shape_cast %40 : vector<1x8x8xf32> to vector<8x8xf32>
    %c0_23 = arith.constant 0 : index
    %c0_24 = arith.constant 0 : index
    %c48 = arith.constant 48 : index
    %42 = vector.load %arg1[%c0_23, %c0_24, %c48] : memref<1x8x96xf32, #tpu.memory_space<vmem>>, vector<1x8x8xf32>
    %43 = vector.shape_cast %42 : vector<1x8x8xf32> to vector<8x8xf32>
    %c0_25 = arith.constant 0 : index
    %c0_26 = arith.constant 0 : index
    %c80 = arith.constant 80 : index
    %44 = vector.load %arg1[%c0_25, %c0_26, %c80] : memref<1x8x96xf32, #tpu.memory_space<vmem>>, vector<1x8x8xf32>
    %45 = vector.shape_cast %44 : vector<1x8x8xf32> to vector<8x8xf32>
    %46 = tpu.transpose %43, [1, 0] : vector<8x8xf32> -> vector<8x8xf32>
    %cst_27 = arith.constant dense<0.000000e+00> : vector<8x8xf32>
    %47 = tpu.matmul %41, %46, %cst_27 {dimension_numbers = #tpu.dot_dimension_numbers<[1], [0], [0], [1], [0, 0, 1, 1], [], []>} : vector<8x8xf32>, vector<8x8xf32>, vector<8x8xf32> -> vector<8x8xf32>
    %cst_28 = arith.constant 0.353553385 : f32
    %48 = vector.broadcast %cst_28 : f32 to vector<8x8xf32>
    %49 = arith.mulf %47, %48 : vector<8x8xf32>
    %cst_29 = arith.constant dense<0xFF800000> : vector<8xf32>
    %50 = vector.multi_reduction <maximumf>, %49, %cst_29 [1] : vector<8x8xf32> to vector<8xf32>
    %51 = vector.shape_cast %50 : vector<8xf32> to vector<8x1xf32>
    %52 = vector.broadcast %51 : vector<8x1xf32> to vector<8x8xf32>
    %53 = arith.subf %49, %52 : vector<8x8xf32>
    %54 = math.exp %53 : vector<8x8xf32>
    %cst_30 = arith.constant dense<0.000000e+00> : vector<8xf32>
    %55 = vector.multi_reduction <add>, %54, %cst_30 [1] : vector<8x8xf32> to vector<8xf32>
    %56 = vector.shape_cast %55 : vector<8xf32> to vector<8x1xf32>
    %57 = vector.broadcast %56 : vector<8x1xf32> to vector<8x8xf32>
    %58 = arith.divf %54, %57 : vector<8x8xf32>
    %cst_31 = arith.constant dense<0.000000e+00> : vector<8x8xf32>
    %59 = tpu.matmul %58, %45, %cst_31 {dimension_numbers = #tpu.dot_dimension_numbers<[1], [0], [0], [1], [0, 0, 1, 1], [], []>} : vector<8x8xf32>, vector<8x8xf32>, vector<8x8xf32> -> vector<8x8xf32>
    %c0_32 = arith.constant 0 : index
    %c0_33 = arith.constant 0 : index
    %c24 = arith.constant 24 : index
    %60 = vector.load %arg1[%c0_32, %c0_33, %c24] : memref<1x8x96xf32, #tpu.memory_space<vmem>>, vector<1x8x8xf32>
    %61 = vector.shape_cast %60 : vector<1x8x8xf32> to vector<8x8xf32>
    %c0_34 = arith.constant 0 : index
    %c0_35 = arith.constant 0 : index
    %c56 = arith.constant 56 : index
    %62 = vector.load %arg1[%c0_34, %c0_35, %c56] : memref<1x8x96xf32, #tpu.memory_space<vmem>>, vector<1x8x8xf32>
    %63 = vector.shape_cast %62 : vector<1x8x8xf32> to vector<8x8xf32>
    %c0_36 = arith.constant 0 : index
    %c0_37 = arith.constant 0 : index
    %c88 = arith.constant 88 : index
    %64 = vector.load %arg1[%c0_36, %c0_37, %c88] : memref<1x8x96xf32, #tpu.memory_space<vmem>>, vector<1x8x8xf32>
    %65 = vector.shape_cast %64 : vector<1x8x8xf32> to vector<8x8xf32>
    %66 = tpu.transpose %63, [1, 0] : vector<8x8xf32> -> vector<8x8xf32>
    %cst_38 = arith.constant dense<0.000000e+00> : vector<8x8xf32>
    %67 = tpu.matmul %61, %66, %cst_38 {dimension_numbers = #tpu.dot_dimension_numbers<[1], [0], [0], [1], [0, 0, 1, 1], [], []>} : vector<8x8xf32>, vector<8x8xf32>, vector<8x8xf32> -> vector<8x8xf32>
    %cst_39 = arith.constant 0.353553385 : f32
    %68 = vector.broadcast %cst_39 : f32 to vector<8x8xf32>
    %69 = arith.mulf %67, %68 : vector<8x8xf32>
    %cst_40 = arith.constant dense<0xFF800000> : vector<8xf32>
    %70 = vector.multi_reduction <maximumf>, %69, %cst_40 [1] : vector<8x8xf32> to vector<8xf32>
    %71 = vector.shape_cast %70 : vector<8xf32> to vector<8x1xf32>
    %72 = vector.broadcast %71 : vector<8x1xf32> to vector<8x8xf32>
    %73 = arith.subf %69, %72 : vector<8x8xf32>
    %74 = math.exp %73 : vector<8x8xf32>
    %cst_41 = arith.constant dense<0.000000e+00> : vector<8xf32>
    %75 = vector.multi_reduction <add>, %74, %cst_41 [1] : vector<8x8xf32> to vector<8xf32>
    %76 = vector.shape_cast %75 : vector<8xf32> to vector<8x1xf32>
    %77 = vector.broadcast %76 : vector<8x1xf32> to vector<8x8xf32>
    %78 = arith.divf %74, %77 : vector<8x8xf32>
    %cst_42 = arith.constant dense<0.000000e+00> : vector<8x8xf32>
    %79 = tpu.matmul %78, %65, %cst_42 {dimension_numbers = #tpu.dot_dimension_numbers<[1], [0], [0], [1], [0, 0, 1, 1], [], []>} : vector<8x8xf32>, vector<8x8xf32>, vector<8x8xf32> -> vector<8x8xf32>
    %80 = tpu.concatenate %19, %39, %59, %79 in 1 : vector<8x8xf32>, vector<8x8xf32>, vector<8x8xf32>, vector<8x8xf32> -> vector<8x32xf32>
    %c0_43 = arith.constant 0 : index
    %c0_44 = arith.constant 0 : index
    %c0_45 = arith.constant 0 : index
    %81 = vector.load %arg2[%c0_43, %c0_44, %c0_45] : memref<1x8x32xf32, #tpu.memory_space<vmem>>, vector<1x8x32xf32>
    %82 = vector.shape_cast %81 : vector<1x8x32xf32> to vector<8x32xf32>
    %83 = vector.shape_cast %80 : vector<8x32xf32> to vector<1x8x32xf32>
    tpu.vector_store %arg2[%c0_43, %c0_44, %c0_45], %83 {strides = array<i32>} : memref<1x8x32xf32, #tpu.memory_space<vmem>>, vector<1x8x32xf32>,
    return
  }
  func.func @transform_0(%arg0: i32) -> (i32, i32, i32) {
    %c0_i32 = arith.constant 0 : i32
    %c0_i32_0 = arith.constant 0 : i32
    %c0_i32_1 = arith.constant 0 : i32
    return %arg0, %c0_i32, %c0_i32_0 : i32, i32, i32
  }
  func.func @transform_1(%arg0: i32) -> (i32, i32, i32) {
    %c0_i32 = arith.constant 0 : i32
    %c0_i32_0 = arith.constant 0 : i32
    %c0_i32_1 = arith.constant 0 : i32
    return %arg0, %c0_i32, %c0_i32_0 : i32, i32, i32
  }
}

module attributes {stable_mosaic.version = 11 : i64} {
  func.func @ln_linear_kernel(%arg0: i32, %arg1: i32, %arg2: memref<16x32xf32, #tpu.memory_space<vmem>>, %arg3: memref<1x32xf32, #tpu.memory_space<vmem>>, %arg4: memref<1x32xf32, #tpu.memory_space<vmem>>, %arg5: memref<32x128xf32, #tpu.memory_space<vmem>>, %arg6: memref<1x128xf32, #tpu.memory_space<vmem>>, %arg7: memref<16x128xf32, #tpu.memory_space<vmem>>) attributes {dimension_semantics = [#tpu.dimension_semantics<parallel>, #tpu.dimension_semantics<parallel>], iteration_bounds = array<i64: 1, 1>, scalar_prefetch = 0 : i64, scratch_operands = 0 : i64, tpu.core_type = #tpu.core_type<tc>, window_params = [{transform_indices = @transform_0, window_bounds = array<i64: 16, 32>}, {pipeline_mode = #tpu.pipeline_mode<synchronous>, transform_indices = @transform_1, window_bounds = array<i64: 1, 32>}, {pipeline_mode = #tpu.pipeline_mode<synchronous>, transform_indices = @transform_2, window_bounds = array<i64: 1, 32>}, {transform_indices = @transform_3, window_bounds = array<i64: 32, 128>}, {transform_indices = @transform_4, window_bounds = array<i64: 1, 128>}, {transform_indices = @transform_5, window_bounds = array<i64: 16, 128>}]} {
    %c0 = arith.constant 0 : index
    %c0_0 = arith.constant 0 : index
    %0 = vector.load %arg2[%c0, %c0_0] : memref<16x32xf32, #tpu.memory_space<vmem>>, vector<16x32xf32>
    %c0_1 = arith.constant 0 : index
    %c0_2 = arith.constant 0 : index
    %1 = vector.load %arg3[%c0_1, %c0_2] : memref<1x32xf32, #tpu.memory_space<vmem>>, vector<1x32xf32>
    %c0_3 = arith.constant 0 : index
    %c0_4 = arith.constant 0 : index
    %2 = vector.load %arg4[%c0_3, %c0_4] : memref<1x32xf32, #tpu.memory_space<vmem>>, vector<1x32xf32>
    %cst = arith.constant dense<0.000000e+00> : vector<16xf32>
    %3 = vector.multi_reduction <add>, %0, %cst [1] : vector<16x32xf32> to vector<16xf32>
    %4 = vector.shape_cast %3 : vector<16xf32> to vector<16x1xf32>
    %cst_5 = arith.constant 3.200000e+01 : f32
    %5 = vector.broadcast %cst_5 : f32 to vector<16x1xf32>
    %6 = arith.divf %4, %5 : vector<16x1xf32>
    %7 = vector.broadcast %6 : vector<16x1xf32> to vector<16x32xf32>
    %8 = arith.subf %0, %7 : vector<16x32xf32>
    %9 = arith.mulf %8, %8 : vector<16x32xf32>
    %cst_6 = arith.constant dense<0.000000e+00> : vector<16xf32>
    %10 = vector.multi_reduction <add>, %9, %cst_6 [1] : vector<16x32xf32> to vector<16xf32>
    %11 = vector.shape_cast %10 : vector<16xf32> to vector<16x1xf32>
    %cst_7 = arith.constant 3.200000e+01 : f32
    %12 = vector.broadcast %cst_7 : f32 to vector<16x1xf32>
    %13 = arith.divf %11, %12 : vector<16x1xf32>
    %cst_8 = arith.constant 9.99999997E-7 : f32
    %14 = vector.broadcast %cst_8 : f32 to vector<16x1xf32>
    %15 = arith.addf %13, %14 : vector<16x1xf32>
    %16 = math.rsqrt %15 : vector<16x1xf32>
    %17 = vector.broadcast %16 : vector<16x1xf32> to vector<16x32xf32>
    %18 = arith.mulf %8, %17 : vector<16x32xf32>
    %19 = vector.broadcast %1 : vector<1x32xf32> to vector<16x32xf32>
    %20 = arith.mulf %18, %19 : vector<16x32xf32>
    %21 = vector.broadcast %2 : vector<1x32xf32> to vector<16x32xf32>
    %22 = arith.addf %20, %21 : vector<16x32xf32>
    %c0_9 = arith.constant 0 : index
    %c0_10 = arith.constant 0 : index
    %23 = vector.load %arg5[%c0_9, %c0_10] : memref<32x128xf32, #tpu.memory_space<vmem>>, vector<32x128xf32>
    %cst_11 = arith.constant dense<0.000000e+00> : vector<16x128xf32>
    %24 = tpu.matmul %22, %23, %cst_11 {dimension_numbers = #tpu.dot_dimension_numbers<[1], [0], [0], [1], [0, 0, 1, 1], [], []>} : vector<16x32xf32>, vector<32x128xf32>, vector<16x128xf32> -> vector<16x128xf32>
    %c0_12 = arith.constant 0 : index
    %c0_13 = arith.constant 0 : index
    %25 = vector.load %arg6[%c0_12, %c0_13] : memref<1x128xf32, #tpu.memory_space<vmem>>, vector<1x128xf32>
    %26 = vector.broadcast %25 : vector<1x128xf32> to vector<16x128xf32>
    %27 = arith.addf %24, %26 : vector<16x128xf32>
    %cst_14 = arith.constant 5.000000e-01 : f32
    %28 = vector.broadcast %cst_14 : f32 to vector<16x128xf32>
    %29 = arith.mulf %28, %27 : vector<16x128xf32>
    %cst_15 = arith.constant 0.707106769 : f32
    %30 = vector.broadcast %cst_15 : f32 to vector<16x128xf32>
    %31 = arith.mulf %27, %30 : vector<16x128xf32>
    %32 = math.absf %31 : vector<16x128xf32>
    %cst_16 = arith.constant 0.327591091 : f32
    %33 = vector.broadcast %cst_16 : f32 to vector<16x128xf32>
    %34 = arith.mulf %33, %32 : vector<16x128xf32>
    %cst_17 = arith.constant 1.000000e+00 : f32
    %35 = vector.broadcast %cst_17 : f32 to vector<16x128xf32>
    %36 = arith.addf %35, %34 : vector<16x128xf32>
    %cst_18 = arith.constant 1.000000e+00 : f32
    %37 = vector.broadcast %cst_18 : f32 to vector<16x128xf32>
    %38 = arith.divf %37, %36 : vector<16x128xf32>
    %cst_19 = arith.constant 1.06140542 : f32
    %39 = vector.broadcast %cst_19 : f32 to vector<16x128xf32>
    %40 = arith.mulf %39, %38 : vector<16x128xf32>
    %cst_20 = arith.constant -1.45315206 : f32
    %41 = vector.broadcast %cst_20 : f32 to vector<16x128xf32>
    %42 = arith.addf %40, %41 : vector<16x128xf32>
    %43 = arith.mulf %42, %38 : vector<16x128xf32>
    %cst_21 = arith.constant 1.42141378 : f32
    %44 = vector.broadcast %cst_21 : f32 to vector<16x128xf32>
    %45 = arith.addf %43, %44 : vector<16x128xf32>
    %46 = arith.mulf %45, %38 : vector<16x128xf32>
    %cst_22 = arith.constant -0.284496725 : f32
    %47 = vector.broadcast %cst_22 : f32 to vector<16x128xf32>
    %48 = arith.addf %46, %47 : vector<16x128xf32>
    %49 = arith.mulf %48, %38 : vector<16x128xf32>
    %cst_23 = arith.constant 0.254829586 : f32
    %50 = vector.broadcast %cst_23 : f32 to vector<16x128xf32>
    %51 = arith.addf %49, %50 : vector<16x128xf32>
    %52 = arith.mulf %51, %38 : vector<16x128xf32>
    %cst_24 = arith.constant 0.000000e+00 : f32
    %53 = vector.broadcast %cst_24 : f32 to vector<16x128xf32>
    %54 = arith.subf %53, %32 : vector<16x128xf32>
    %55 = arith.mulf %54, %32 : vector<16x128xf32>
    %56 = math.exp %55 : vector<16x128xf32>
    %57 = arith.mulf %52, %56 : vector<16x128xf32>
    %cst_25 = arith.constant 1.000000e+00 : f32
    %58 = vector.broadcast %cst_25 : f32 to vector<16x128xf32>
    %59 = arith.subf %58, %57 : vector<16x128xf32>
    %cst_26 = arith.constant 0.000000e+00 : f32
    %60 = vector.broadcast %cst_26 : f32 to vector<16x128xf32>
    %61 = arith.cmpf oge, %31, %60 : vector<16x128xf32>
    %cst_27 = arith.constant 0.000000e+00 : f32
    %62 = vector.broadcast %cst_27 : f32 to vector<16x128xf32>
    %63 = arith.subf %62, %59 : vector<16x128xf32>
    %64 = arith.select %61, %59, %63 : vector<16x128xi1>, vector<16x128xf32>
    %cst_28 = arith.constant 1.000000e+00 : f32
    %65 = vector.broadcast %cst_28 : f32 to vector<16x128xf32>
    %66 = arith.addf %65, %64 : vector<16x128xf32>
    %67 = arith.mulf %29, %66 : vector<16x128xf32>
    %c0_29 = arith.constant 0 : index
    %c0_30 = arith.constant 0 : index
    %68 = vector.load %arg7[%c0_29, %c0_30] : memref<16x128xf32, #tpu.memory_space<vmem>>, vector<16x128xf32>
    tpu.vector_store %arg7[%c0_29, %c0_30], %67 {strides = array<i32>} : memref<16x128xf32, #tpu.memory_space<vmem>>, vector<16x128xf32>,
    return
  }
  func.func @transform_0(%arg0: i32, %arg1: i32) -> (i32, i32) {
    %c0_i32 = arith.constant 0 : i32
    %c0_i32_0 = arith.constant 0 : i32
    return %arg0, %c0_i32 : i32, i32
  }
  func.func @transform_1(%arg0: i32, %arg1: i32) -> (i32, i32) {
    %c0_i32 = arith.constant 0 : i32
    %c0_i32_0 = arith.constant 0 : i32
    %c0_i32_1 = arith.constant 0 : i32
    return %c0_i32, %c0_i32_0 : i32, i32
  }
  func.func @transform_2(%arg0: i32, %arg1: i32) -> (i32, i32) {
    %c0_i32 = arith.constant 0 : i32
    %c0_i32_0 = arith.constant 0 : i32
    %c0_i32_1 = arith.constant 0 : i32
    return %c0_i32, %c0_i32_0 : i32, i32
  }
  func.func @transform_3(%arg0: i32, %arg1: i32) -> (i32, i32) {
    %c0_i32 = arith.constant 0 : i32
    %c0_i32_0 = arith.constant 0 : i32
    return %c0_i32, %arg1 : i32, i32
  }
  func.func @transform_4(%arg0: i32, %arg1: i32) -> (i32, i32) {
    %c0_i32 = arith.constant 0 : i32
    %c0_i32_0 = arith.constant 0 : i32
    return %c0_i32, %arg1 : i32, i32
  }
  func.func @transform_5(%arg0: i32, %arg1: i32) -> (i32, i32) {
    %c0_i32 = arith.constant 0 : i32
    return %arg0, %arg1 : i32, i32
  }
}

module attributes {stable_mosaic.version = 11 : i64} {
  func.func @linear_residual_kernel(%arg0: i32, %arg1: i32, %arg2: memref<16x32xf32, #tpu.memory_space<vmem>>, %arg3: memref<32x32xf32, #tpu.memory_space<vmem>>, %arg4: memref<1x32xf32, #tpu.memory_space<vmem>>, %arg5: memref<16x32xf32, #tpu.memory_space<vmem>>, %arg6: memref<16x32xf32, #tpu.memory_space<vmem>>) attributes {dimension_semantics = [#tpu.dimension_semantics<parallel>, #tpu.dimension_semantics<parallel>], iteration_bounds = array<i64: 1, 1>, scalar_prefetch = 0 : i64, scratch_operands = 0 : i64, tpu.core_type = #tpu.core_type<tc>, window_params = [{transform_indices = @transform_0, window_bounds = array<i64: 16, 32>}, {transform_indices = @transform_1, window_bounds = array<i64: 32, 32>}, {transform_indices = @transform_2, window_bounds = array<i64: 1, 32>}, {transform_indices = @transform_3, window_bounds = array<i64: 16, 32>}, {transform_indices = @transform_4, window_bounds = array<i64: 16, 32>}]} {
    %c0 = arith.constant 0 : index
    %c0_0 = arith.constant 0 : index
    %0 = vector.load %arg2[%c0, %c0_0] : memref<16x32xf32, #tpu.memory_space<vmem>>, vector<16x32xf32>
    %c0_1 = arith.constant 0 : index
    %c0_2 = arith.constant 0 : index
    %1 = vector.load %arg3[%c0_1, %c0_2] : memref<32x32xf32, #tpu.memory_space<vmem>>, vector<32x32xf32>
    %cst = arith.constant dense<0.000000e+00> : vector<16x32xf32>
    %2 = tpu.matmul %0, %1, %cst {dimension_numbers = #tpu.dot_dimension_numbers<[1], [0], [0], [1], [0, 0, 1, 1], [], []>} : vector<16x32xf32>, vector<32x32xf32>, vector<16x32xf32> -> vector<16x32xf32>
    %c0_3 = arith.constant 0 : index
    %c0_4 = arith.constant 0 : index
    %3 = vector.load %arg4[%c0_3, %c0_4] : memref<1x32xf32, #tpu.memory_space<vmem>>, vector<1x32xf32>
    %4 = vector.broadcast %3 : vector<1x32xf32> to vector<16x32xf32>
    %5 = arith.addf %2, %4 : vector<16x32xf32>
    %c0_5 = arith.constant 0 : index
    %c0_6 = arith.constant 0 : index
    %6 = vector.load %arg5[%c0_5, %c0_6] : memref<16x32xf32, #tpu.memory_space<vmem>>, vector<16x32xf32>
    %7 = arith.addf %5, %6 : vector<16x32xf32>
    %c0_7 = arith.constant 0 : index
    %c0_8 = arith.constant 0 : index
    %8 = vector.load %arg6[%c0_7, %c0_8] : memref<16x32xf32, #tpu.memory_space<vmem>>, vector<16x32xf32>
    tpu.vector_store %arg6[%c0_7, %c0_8], %7 {strides = array<i32>} : memref<16x32xf32, #tpu.memory_space<vmem>>, vector<16x32xf32>,
    return
  }
  func.func @transform_0(%arg0: i32, %arg1: i32) -> (i32, i32) {
    %c0_i32 = arith.constant 0 : i32
    %c0_i32_0 = arith.constant 0 : i32
    return %arg0, %c0_i32 : i32, i32
  }
  func.func @transform_1(%arg0: i32, %arg1: i32) -> (i32, i32) {
    %c0_i32 = arith.constant 0 : i32
    %c0_i32_0 = arith.constant 0 : i32
    return %c0_i32, %arg1 : i32, i32
  }
  func.func @transform_2(%arg0: i32, %arg1: i32) -> (i32, i32) {
    %c0_i32 = arith.constant 0 : i32
    %c0_i32_0 = arith.constant 0 : i32
    return %c0_i32, %arg1 : i32, i32
  }
  func.func @transform_3(%arg0: i32, %arg1: i32) -> (i32, i32) {
    %c0_i32 = arith.constant 0 : i32
    return %arg0, %arg1 : i32, i32
  }
  func.func @transform_4(%arg0: i32, %arg1: i32) -> (i32, i32) {
    %c0_i32 = arith.constant 0 : i32
    return %arg0, %arg1 : i32, i32
  }
}

module attributes {stable_mosaic.version = 11 : i64} {
  func.func @linear_residual_kernel(%arg0: i32, %arg1: i32, %arg2: memref<16x128xf32, #tpu.memory_space<vmem>>, %arg3: memref<128x32xf32, #tpu.memory_space<vmem>>, %arg4: memref<1x32xf32, #tpu.memory_space<vmem>>, %arg5: memref<16x32xf32, #tpu.memory_space<vmem>>, %arg6: memref<16x32xf32, #tpu.memory_space<vmem>>) attributes {dimension_semantics = [#tpu.dimension_semantics<parallel>, #tpu.dimension_semantics<parallel>], iteration_bounds = array<i64: 1, 1>, scalar_prefetch = 0 : i64, scratch_operands = 0 : i64, tpu.core_type = #tpu.core_type<tc>, window_params = [{transform_indices = @transform_0, window_bounds = array<i64: 16, 128>}, {transform_indices = @transform_1, window_bounds = array<i64: 128, 32>}, {transform_indices = @transform_2, window_bounds = array<i64: 1, 32>}, {transform_indices = @transform_3, window_bounds = array<i64: 16, 32>}, {transform_indices = @transform_4, window_bounds = array<i64: 16, 32>}]} {
    %c0 = arith.constant 0 : index
    %c0_0 = arith.constant 0 : index
    %0 = vector.load %arg2[%c0, %c0_0] : memref<16x128xf32, #tpu.memory_space<vmem>>, vector<16x128xf32>
    %c0_1 = arith.constant 0 : index
    %c0_2 = arith.constant 0 : index
    %1 = vector.load %arg3[%c0_1, %c0_2] : memref<128x32xf32, #tpu.memory_space<vmem>>, vector<128x32xf32>
    %cst = arith.constant dense<0.000000e+00> : vector<16x32xf32>
    %2 = tpu.matmul %0, %1, %cst {dimension_numbers = #tpu.dot_dimension_numbers<[1], [0], [0], [1], [0, 0, 1, 1], [], []>} : vector<16x128xf32>, vector<128x32xf32>, vector<16x32xf32> -> vector<16x32xf32>
    %c0_3 = arith.constant 0 : index
    %c0_4 = arith.constant 0 : index
    %3 = vector.load %arg4[%c0_3, %c0_4] : memref<1x32xf32, #tpu.memory_space<vmem>>, vector<1x32xf32>
    %4 = vector.broadcast %3 : vector<1x32xf32> to vector<16x32xf32>
    %5 = arith.addf %2, %4 : vector<16x32xf32>
    %c0_5 = arith.constant 0 : index
    %c0_6 = arith.constant 0 : index
    %6 = vector.load %arg5[%c0_5, %c0_6] : memref<16x32xf32, #tpu.memory_space<vmem>>, vector<16x32xf32>
    %7 = arith.addf %5, %6 : vector<16x32xf32>
    %c0_7 = arith.constant 0 : index
    %c0_8 = arith.constant 0 : index
    %8 = vector.load %arg6[%c0_7, %c0_8] : memref<16x32xf32, #tpu.memory_space<vmem>>, vector<16x32xf32>
    tpu.vector_store %arg6[%c0_7, %c0_8], %7 {strides = array<i32>} : memref<16x32xf32, #tpu.memory_space<vmem>>, vector<16x32xf32>,
    return
  }
  func.func @transform_0(%arg0: i32, %arg1: i32) -> (i32, i32) {
    %c0_i32 = arith.constant 0 : i32
    %c0_i32_0 = arith.constant 0 : i32
    return %arg0, %c0_i32 : i32, i32
  }
  func.func @transform_1(%arg0: i32, %arg1: i32) -> (i32, i32) {
    %c0_i32 = arith.constant 0 : i32
    %c0_i32_0 = arith.constant 0 : i32
    return %c0_i32, %arg1 : i32, i32
  }
  func.func @transform_2(%arg0: i32, %arg1: i32) -> (i32, i32) {
    %c0_i32 = arith.constant 0 : i32
    %c0_i32_0 = arith.constant 0 : i32
    return %c0_i32, %arg1 : i32, i32
  }
  func.func @transform_3(%arg0: i32, %arg1: i32) -> (i32, i32) {
    %c0_i32 = arith.constant 0 : i32
    return %arg0, %arg1 : i32, i32
  }
  func.func @transform_4(%arg0: i32, %arg1: i32) -> (i32, i32) {
    %c0_i32 = arith.constant 0 : i32
    return %arg0, %arg1 : i32, i32
  }
}

</mosaic_0001>

<llo_original>
// kernel: block_forward.5
$region0: #{block_forward.5}
  #allocation0 [shape = 'u32[]', space=smem, size = 0x4, offset = 0x4, fixed_abs, tag = 'smem constant byte address 0x4 - core index']
  #allocation1 [shape = 'u32[144,128]{1,0:T(1,128)}', space=vmem, size = 0x12000, scoped, tag = 'internal scratch']
  %s0 = inlined_call_operand.vmem [shape: f32[16,32], index: 0, kind: input, shape index: {}]
  %s1 = inlined_call_operand.vmem [shape: f32[1,32], index: 1, kind: input, shape index: {}]
  %s2 = inlined_call_operand.vmem [shape: f32[1,32], index: 2, kind: input, shape index: {}]
  %s3 = inlined_call_operand.vmem [shape: f32[32,96], index: 3, kind: input, shape index: {}]
  %s4 = inlined_call_operand.vmem [shape: f32[1,96], index: 4, kind: input, shape index: {}]
  %s5 = inlined_call_operand.vmem [shape: f32[16,96], index: 5, kind: output, shape index: {}]
  %s6 = sld [smem:[#allocation0]]
  $region30: #{block_forward.5} parent=0
    _
  %s8 = ssub.s32 1, %s6
  %s9 = scalar_select 0, %s8, %s6
  // Predicated region
  $region2: #{block_forward.5} parent=0 // pred_check
    _
  $region3: #{block_forward.5} parent=0 // pred_check_branch
    %11 = sbr.rel (0) target = $region5
  $region4: #{block_forward.5} parent=0 // pred_region
    _
  $region5: #{block_forward.5} parent=0 // pred_fallthru
    _
  // Predicated region
  $region6: #{block_forward.5} parent=0 // pred_check
    _
  $region7: #{block_forward.5} parent=0 // pred_check_branch
    %13 = sbr.rel (0) target = $region9
  $region8: #{block_forward.5} parent=0 // pred_region
    _
  $region9: #{block_forward.5} parent=0 // pred_fallthru
    _
  // Predicated region
  $region10: #{block_forward.5} parent=0 // pred_check
    _
  $region11: #{block_forward.5} parent=0 // pred_check_branch
    %15 = sbr.rel (0) target = $region13
  $region12: #{block_forward.5} parent=0 // pred_region
    _
  $region13: #{block_forward.5} parent=0 // pred_fallthru
    _
  // Predicated region
  $region14: #{block_forward.5} parent=0 // pred_check
    _
  $region15: #{block_forward.5} parent=0 // pred_check_branch
    %17 = sbr.rel (0) target = $region17
  $region16: #{block_forward.5} parent=0 // pred_region
    _
  $region17: #{block_forward.5} parent=0 // pred_fallthru
    _
  // Predicated region
  $region18: #{block_forward.5} parent=0 // pred_check
    _
  $region19: #{block_forward.5} parent=0 // pred_check_branch
    %19 = sbr.rel (0) target = $region21
  $region20: #{block_forward.5} parent=0 // pred_region
    _
  $region21: #{block_forward.5} parent=0 // pred_fallthru
    _
  %v20 = vld [vmem:[%s0] sm:$0xff]
  %v21 = vld [vmem:[%s0 + $0x8] sm:$0xff]
  %v22 = vld [vmem:[%s1] sm:$0x1]
  %v23 = vld [vmem:[%s2] sm:$0x1]
  %vm24 = vcmask 261120
  %v25 = vsel %vm24, %v20, 0.0
  %26 = vadd.xlane.f32.xlu0 %v25
  %v27 = vpop.xlane.xlu0 %26
  %v28 = vsel %vm24, %v21, 0.0
  %29 = vadd.xlane.f32.xlu0 %v28
  %v30 = vpop.xlane.xlu0 %29
  %v31 = vrcp.pop 32.0
  %v32 = vmul.f32 %v27, %v31
  %v33 = vmul.f32 %v30, %v31
  %v34 = vsub.f32 %v20, %v32
  %v35 = vsub.f32 %v21, %v33
  %v36 = vmul.f32 %v34, %v34
  %v37 = vmul.f32 %v35, %v35
  %v38 = vsel %vm24, %v36, 0.0
  %39 = vadd.xlane.f32.xlu0 %v38
  %v40 = vpop.xlane.xlu0 %39
  %v41 = vsel %vm24, %v37, 0.0
  %42 = vadd.xlane.f32.xlu0 %v41
  %v43 = vpop.xlane.xlu0 %42
  %v44 = vmul.f32 %v40, %v31
  %v45 = vmul.f32 %v43, %v31
  %v46 = vadd.f32 %v44, 1e-06
  %v47 = vadd.f32 %v45, 1e-06
  %v48 = vrsqrt.pop %v46
  %v49 = vrsqrt.pop %v47
  %v50 = vmul.f32 %v34, %v48
  %v51 = vmul.f32 %v35, %v49
  %v53 = vlaneseq
  %v54 = vshrl.u32 %v53, 7
  %v55 = vsub.s32 0, %v54
  %v56 = vrot.slane %v22, %v55
  %v58 = vmul.f32 %v50, %v56
  %v59 = vmul.f32 %v51, %v56
  %v61 = vlaneseq
  %v62 = vshrl.u32 %v61, 7
  %v63 = vsub.s32 0, %v62
  %v64 = vrot.slane %v23, %v63
  %v66 = vadd.f32 %v58, %v64
  %v67 = vadd.f32 %v59, %v64
  %v68 = vld [vmem:[%s3] sm:$0xff]
  %v69 = vld [vmem:[%s3 + $0x8] sm:$0xff]
  %v70 = vld [vmem:[%s3 + $0x10] sm:$0xff]
  %v71 = vld [vmem:[%s3 + $0x18] sm:$0xff]
  %v72 = vld [vmem:[%s4] sm:$0x1]
  %v74 = vlaneseq
  %v75 = vshrl.u32 %v74, 7
  %v76 = vsub.s32 0, %v75
  %v77 = vrot.slane %v72, %v76
  %v80 = vsel %vm24, %v66, 0
  %v83 = vsel %vm24, %v67, 0
  %85 = vmatprep.subr.mxu0 0.0
  %86 = vmatpush1.msra.mxu0 %v68
  %87 = vmatprep.subr.mxu0 0.0
  %88 = vmatpush1.msra.mxu0 %v69
  %89 = vmatprep.subr.mxu0 0.0
  %90 = vmatpush1.msra.mxu0 %v70
  %91 = vmatprep.subr.mxu0 0.0
  %92 = vmatpush1.msra.mxu0 %v71
  %93 = vmatprep.subr.mxu0 0.0
  %94 = vmatpush1.msra.mxu0 0.0
  %95 = vmatprep.subr.mxu0 0.0
  %96 = vmatpush1.msra.mxu0 0.0
  %97 = vmatprep.subr.mxu0 0.0
  %98 = vmatpush1.msra.mxu0 0.0
  %99 = vmatprep.subr.mxu0 0.0
  %100 = vmatpush1.msra.mxu0 0.0
  %101 = vmatprep.subr.mxu0 0.0
  %102 = vmatpush1.msra.mxu0 0.0
  %103 = vmatprep.subr.mxu0 0.0
  %104 = vmatpush1.msra.mxu0 0.0
  %105 = vmatprep.subr.mxu0 0.0
  %106 = vmatpush1.msra.mxu0 0.0
  %107 = vmatprep.subr.mxu0 0.0
  %108 = vmatpush1.msra.mxu0 0.0
  %109 = vmatprep.subr.mxu0 0.0
  %110 = vmatpush1.msra.mxu0 0.0
  %111 = vmatprep.subr.mxu0 0.0
  %112 = vmatpush1.msra.mxu0 0.0
  %113 = vmatprep.subr.mxu0 0.0
  %114 = vmatpush1.msra.mxu0 0.0
  %115 = vmatprep.subr.mxu0 0.0
  %116 = vmatpush1.msra.mxu0 0.0
  %117 = vmatprep.subr.mxu0 0.0
  %118 = vmatpush1.msra.mxu0 0.0
  %119 = vmatprep.subr.mxu0 0.0
  %120 = vmatpush1.msra.mxu0 0.0
  %121 = vmatprep.subr.mxu0 0.0
  %122 = vmatpush1.msra.mxu0 0.0
  %123 = vmatprep.subr.mxu0 0.0
  %124 = vmatpush1.msra.mxu0 0.0
  %125 = vmatprep.subr.mxu0 0.0
  %126 = vmatpush1.msra.mxu0 0.0
  %127 = vmatprep.subr.mxu0 0.0
  %128 = vmatpush1.msra.mxu0 0.0
  %129 = vmatprep.subr.mxu0 0.0
  %130 = vmatpush1.msra.mxu0 0.0
  %131 = vmatprep.subr.mxu0 0.0
  %132 = vmatpush1.msra.mxu0 0.0
  %133 = vmatprep.subr.mxu0 0.0
  %134 = vmatpush1.msra.mxu0 0.0
  %135 = vmatprep.subr.mxu0 0.0
  %136 = vmatpush1.msra.mxu0 0.0
  %137 = vmatprep.subr.mxu0 0.0
  %138 = vmatpush1.msra.mxu0 0.0
  %139 = vmatprep.subr.mxu0 0.0
  %140 = vmatpush1.msra.mxu0 0.0
  %141 = vmatprep.subr.mxu0 0.0
  %142 = vmatpush1.msra.mxu0 0.0
  %143 = vmatprep.subr.mxu0 0.0
  %144 = vmatpush1.msra.mxu0 0.0
  %145 = vmatprep.subr.mxu0 0.0
  %146 = vmatpush1.msra.mxu0 0.0
  %147 = vmatprep.subr.mxu0 0.0
  %148 = vmatpush1.msra.mxu0 0.0
  %149 = vmatprep.mubr.f32.mxu0 0.0
  %150 = vmatmul.mubr.f32.gmra.mrb[0].mxu0 %v80
  %v151 = vpop.f32.mrb[0].mxu0
  %v152 = vadd.f32 %v77, %v151
  %v153 = vpop.f32.mrb[0].mxu0
  %154 = vmatprep.mubr.f32.mxu0 0.0
  %155 = vmatmul.mubr.f32.gmra.mrb[0].mxu0 %v83
  %v156 = vpop.f32.mrb[0].mxu0
  %v157 = vadd.f32 %v77, %v156
  %v158 = vpop.f32.mrb[0].mxu0
  %159 = vdwg.mxu0
  %vm160 = vcmask 785408
  %161 = vst.msk [vmem:[%s5] sm:$0xff] %vm160, %v152
  %162 = vst.msk [vmem:[%s5 + $0x8] sm:$0xff] %vm160, %v157
  // Predicated region
  $region22: #{block_forward.5} parent=0 // pred_check
    _
  $region23: #{block_forward.5} parent=0 // pred_check_branch
    %164 = sbr.rel (0) target = $region25
  $region24: #{block_forward.5} parent=0 // pred_region
    _
  $region25: #{block_forward.5} parent=0 // pred_fallthru
    _
  // Predicated region
  $region26: #{block_forward.5} parent=0 // pred_check
    _
  $region27: #{block_forward.5} parent=0 // pred_check_branch
    %166 = sbr.rel (0) target = $region29
  $region28: #{block_forward.5} parent=0 // pred_region
    _
  $region29: #{block_forward.5} parent=0 // pred_fallthru
    _

// kernel: block_forward.7
$region0: #{block_forward.7}
  #allocation0 [shape = 'u32[]', space=smem, size = 0x4, offset = 0x4, fixed_abs, tag = 'smem constant byte address 0x4 - core index']
  #allocation1 [shape = 'u32[144,128]{1,0:T(1,128)}', space=vmem, size = 0x12000, scoped, tag = 'internal scratch']
  %s0 = inlined_call_operand.vmem [shape: f32[16,32], index: 0, kind: input, shape index: {}]
  %s1 = inlined_call_operand.vmem [shape: f32[32,32], index: 1, kind: input, shape index: {}]
  %s2 = inlined_call_operand.vmem [shape: f32[1,32], index: 2, kind: input, shape index: {}]
  %s3 = inlined_call_operand.vmem [shape: f32[16,32], index: 3, kind: input, shape index: {}]
  %s4 = inlined_call_operand.vmem [shape: f32[16,32], index: 4, kind: output, shape index: {}]
  %s5 = sld [smem:[#allocation0]]
  $region26: #{block_forward.7} parent=0
    _
  %s7 = ssub.s32 1, %s5
  %s8 = scalar_select 0, %s7, %s5
  // Predicated region
  $region2: #{block_forward.7} parent=0 // pred_check
    _
  $region3: #{block_forward.7} parent=0 // pred_check_branch
    %10 = sbr.rel (0) target = $region5
  $region4: #{block_forward.7} parent=0 // pred_region
    _
  $region5: #{block_forward.7} parent=0 // pred_fallthru
    _
  // Predicated region
  $region6: #{block_forward.7} parent=0 // pred_check
    _
  $region7: #{block_forward.7} parent=0 // pred_check_branch
    %12 = sbr.rel (0) target = $region9
  $region8: #{block_forward.7} parent=0 // pred_region
    _
  $region9: #{block_forward.7} parent=0 // pred_fallthru
    _
  // Predicated region
  $region10: #{block_forward.7} parent=0 // pred_check
    _
  $region11: #{block_forward.7} parent=0 // pred_check_branch
    %14 = sbr.rel (0) target = $region13
  $region12: #{block_forward.7} parent=0 // pred_region
    _
  $region13: #{block_forward.7} parent=0 // pred_fallthru
    _
  // Predicated region
  $region14: #{block_forward.7} parent=0 // pred_check
    _
  $region15: #{block_forward.7} parent=0 // pred_check_branch
    %16 = sbr.rel (0) target = $region17
  $region16: #{block_forward.7} parent=0 // pred_region
    _
  $region17: #{block_forward.7} parent=0 // pred_fallthru
    _
  %v17 = vld [vmem:[%s0] sm:$0xff]
  %v18 = vld [vmem:[%s0 + $0x8] sm:$0xff]
  %v19 = vld [vmem:[%s1] sm:$0xff]
  %v20 = vld [vmem:[%s1 + $0x8] sm:$0xff]
  %v21 = vld [vmem:[%s1 + $0x10] sm:$0xff]
  %v22 = vld [vmem:[%s1 + $0x18] sm:$0xff]
  %v23 = vld [vmem:[%s2] sm:$0x1]
  %v25 = vlaneseq
  %v26 = vshrl.u32 %v25, 7
  %v27 = vsub.s32 0, %v26
  %v28 = vrot.slane %v23, %v27
  %vm30 = vcmask 261120
  %v32 = vsel %vm30, %v17, 0
  %v35 = vsel %vm30, %v18, 0
  %37 = vmatprep.subr.mxu0 0.0
  %38 = vmatpush1.msra.mxu0 %v19
  %39 = vmatprep.subr.mxu0 0.0
  %40 = vmatpush1.msra.mxu0 %v20
  %41 = vmatprep.subr.mxu0 0.0
  %42 = vmatpush1.msra.mxu0 %v21
  %43 = vmatprep.subr.mxu0 0.0
  %44 = vmatpush1.msra.mxu0 %v22
  %45 = vmatprep.subr.mxu0 0.0
  %46 = vmatpush1.msra.mxu0 0.0
  %47 = vmatprep.subr.mxu0 0.0
  %48 = vmatpush1.msra.mxu0 0.0
  %49 = vmatprep.subr.mxu0 0.0
  %50 = vmatpush1.msra.mxu0 0.0
  %51 = vmatprep.subr.mxu0 0.0
  %52 = vmatpush1.msra.mxu0 0.0
  %53 = vmatprep.subr.mxu0 0.0
  %54 = vmatpush1.msra.mxu0 0.0
  %55 = vmatprep.subr.mxu0 0.0
  %56 = vmatpush1.msra.mxu0 0.0
  %57 = vmatprep.subr.mxu0 0.0
  %58 = vmatpush1.msra.mxu0 0.0
  %59 = vmatprep.subr.mxu0 0.0
  %60 = vmatpush1.msra.mxu0 0.0
  %61 = vmatprep.subr.mxu0 0.0
  %62 = vmatpush1.msra.mxu0 0.0
  %63 = vmatprep.subr.mxu0 0.0
  %64 = vmatpush1.msra.mxu0 0.0
  %65 = vmatprep.subr.mxu0 0.0
  %66 = vmatpush1.msra.mxu0 0.0
  %67 = vmatprep.subr.mxu0 0.0
  %68 = vmatpush1.msra.mxu0 0.0
  %69 = vmatprep.subr.mxu0 0.0
  %70 = vmatpush1.msra.mxu0 0.0
  %71 = vmatprep.subr.mxu0 0.0
  %72 = vmatpush1.msra.mxu0 0.0
  %73 = vmatprep.subr.mxu0 0.0
  %74 = vmatpush1.msra.mxu0 0.0
  %75 = vmatprep.subr.mxu0 0.0
  %76 = vmatpush1.msra.mxu0 0.0
  %77 = vmatprep.subr.mxu0 0.0
  %78 = vmatpush1.msra.mxu0 0.0
  %79 = vmatprep.subr.mxu0 0.0
  %80 = vmatpush1.msra.mxu0 0.0
  %81 = vmatprep.subr.mxu0 0.0
  %82 = vmatpush1.msra.mxu0 0.0
  %83 = vmatprep.subr.mxu0 0.0
  %84 = vmatpush1.msra.mxu0 0.0
  %85 = vmatprep.subr.mxu0 0.0
  %86 = vmatpush1.msra.mxu0 0.0
  %87 = vmatprep.subr.mxu0 0.0
  %88 = vmatpush1.msra.mxu0 0.0
  %89 = vmatprep.subr.mxu0 0.0
  %90 = vmatpush1.msra.mxu0 0.0
  %91 = vmatprep.subr.mxu0 0.0
  %92 = vmatpush1.msra.mxu0 0.0
  %93 = vmatprep.subr.mxu0 0.0
  %94 = vmatpush1.msra.mxu0 0.0
  %95 = vmatprep.subr.mxu0 0.0
  %96 = vmatpush1.msra.mxu0 0.0
  %97 = vmatprep.subr.mxu0 0.0
  %98 = vmatpush1.msra.mxu0 0.0
  %99 = vmatprep.subr.mxu0 0.0
  %100 = vmatpush1.msra.mxu0 0.0
  %101 = vmatprep.mubr.f32.mxu0 0.0
  %102 = vmatmul.mubr.f32.gmra.mrb[0].mxu0 %v32
  %v103 = vpop.f32.mrb[0].mxu0
  %v104 = vadd.f32 %v28, %v103
  %v105 = vpop.f32.mrb[0].mxu0
  %106 = vmatprep.mubr.f32.mxu0 0.0
  %107 = vmatmul.mubr.f32.gmra.mrb[0].mxu0 %v35
  %v108 = vpop.f32.mrb[0].mxu0
  %v109 = vadd.f32 %v28, %v108
  %v110 = vpop.f32.mrb[0].mxu0
  %111 = vdwg.mxu0
  %v112 = vld [vmem:[%s3] sm:$0xff]
  %v113 = vld [vmem:[%s3 + $0x8] sm:$0xff]
  %v114 = vadd.f32 %v104, %v112
  %v115 = vadd.f32 %v109, %v113
  %116 = vst.msk [vmem:[%s4] sm:$0xff] %vm30, %v114
  %117 = vst.msk [vmem:[%s4 + $0x8] sm:$0xff] %vm30, %v115
  // Predicated region
  $region18: #{block_forward.7} parent=0 // pred_check
    _
  $region19: #{block_forward.7} parent=0 // pred_check_branch
    %119 = sbr.rel (0) target = $region21
  $region20: #{block_forward.7} parent=0 // pred_region
    _
  $region21: #{block_forward.7} parent=0 // pred_fallthru
    _
  // Predicated region
  $region22: #{block_forward.7} parent=0 // pred_check
    _
  $region23: #{block_forward.7} parent=0 // pred_check_branch
    %121 = sbr.rel (0) target = $region25
  $region24: #{block_forward.7} parent=0 // pred_region
    _
  $region25: #{block_forward.7} parent=0 // pred_fallthru
    _

// kernel: block_forward.8
$region0: #{block_forward.8}
  #allocation0 [shape = 'u32[]', space=smem, size = 0x4, offset = 0x4, fixed_abs, tag = 'smem constant byte address 0x4 - core index']
  #allocation1 [shape = 'u32[144,128]{1,0:T(1,128)}', space=vmem, size = 0x12000, scoped, tag = 'internal scratch']
  %s0 = inlined_call_operand.vmem [shape: f32[16,32], index: 0, kind: input, shape index: {}]
  %s1 = inlined_call_operand.vmem [shape: f32[1,32], index: 1, kind: input, shape index: {}]
  %s2 = inlined_call_operand.vmem [shape: f32[1,32], index: 2, kind: input, shape index: {}]
  %s3 = inlined_call_operand.vmem [shape: f32[32,128], index: 3, kind: input, shape index: {}]
  %s4 = inlined_call_operand.vmem [shape: f32[1,128], index: 4, kind: input, shape index: {}]
  %s5 = inlined_call_operand.vmem [shape: f32[16,128], index: 5, kind: output, shape index: {}]
  %s6 = sld [smem:[#allocation0]]
  $region30: #{block_forward.8} parent=0
    _
  %s8 = ssub.s32 1, %s6
  %s9 = scalar_select 0, %s8, %s6
  // Predicated region
  $region2: #{block_forward.8} parent=0 // pred_check
    _
  $region3: #{block_forward.8} parent=0 // pred_check_branch
    %11 = sbr.rel (0) target = $region5
  $region4: #{block_forward.8} parent=0 // pred_region
    _
  $region5: #{block_forward.8} parent=0 // pred_fallthru
    _
  // Predicated region
  $region6: #{block_forward.8} parent=0 // pred_check
    _
  $region7: #{block_forward.8} parent=0 // pred_check_branch
    %13 = sbr.rel (0) target = $region9
  $region8: #{block_forward.8} parent=0 // pred_region
    _
  $region9: #{block_forward.8} parent=0 // pred_fallthru
    _
  // Predicated region
  $region10: #{block_forward.8} parent=0 // pred_check
    _
  $region11: #{block_forward.8} parent=0 // pred_check_branch
    %15 = sbr.rel (0) target = $region13
  $region12: #{block_forward.8} parent=0 // pred_region
    _
  $region13: #{block_forward.8} parent=0 // pred_fallthru
    _
  // Predicated region
  $region14: #{block_forward.8} parent=0 // pred_check
    _
  $region15: #{block_forward.8} parent=0 // pred_check_branch
    %17 = sbr.rel (0) target = $region17
  $region16: #{block_forward.8} parent=0 // pred_region
    _
  $region17: #{block_forward.8} parent=0 // pred_fallthru
    _
  // Predicated region
  $region18: #{block_forward.8} parent=0 // pred_check
    _
  $region19: #{block_forward.8} parent=0 // pred_check_branch
    %19 = sbr.rel (0) target = $region21
  $region20: #{block_forward.8} parent=0 // pred_region
    _
  $region21: #{block_forward.8} parent=0 // pred_fallthru
    _
  %v20 = vld [vmem:[%s0] sm:$0xff]
  %v21 = vld [vmem:[%s0 + $0x8] sm:$0xff]
  %v22 = vld [vmem:[%s1] sm:$0x1]
  %v23 = vld [vmem:[%s2] sm:$0x1]
  %vm24 = vcmask 261120
  %v25 = vsel %vm24, %v20, 0.0
  %26 = vadd.xlane.f32.xlu0 %v25
  %v27 = vpop.xlane.xlu0 %26
  %v28 = vsel %vm24, %v21, 0.0
  %29 = vadd.xlane.f32.xlu0 %v28
  %v30 = vpop.xlane.xlu0 %29
  %v31 = vrcp.pop 32.0
  %v32 = vmul.f32 %v27, %v31
  %v33 = vmul.f32 %v30, %v31
  %v34 = vsub.f32 %v20, %v32
  %v35 = vsub.f32 %v21, %v33
  %v36 = vmul.f32 %v34, %v34
  %v37 = vmul.f32 %v35, %v35
  %v38 = vsel %vm24, %v36, 0.0
  %39 = vadd.xlane.f32.xlu0 %v38
  %v40 = vpop.xlane.xlu0 %39
  %v41 = vsel %vm24, %v37, 0.0
  %42 = vadd.xlane.f32.xlu0 %v41
  %v43 = vpop.xlane.xlu0 %42
  %v44 = vmul.f32 %v40, %v31
  %v45 = vmul.f32 %v43, %v31
  %v46 = vadd.f32 %v44, 1e-06
  %v47 = vadd.f32 %v45, 1e-06
  %v48 = vrsqrt.pop %v46
  %v49 = vrsqrt.pop %v47
  %v50 = vmul.f32 %v34, %v48
  %v51 = vmul.f32 %v35, %v49
  %v53 = vlaneseq
  %v54 = vshrl.u32 %v53, 7
  %v55 = vsub.s32 0, %v54
  %v56 = vrot.slane %v22, %v55
  %v58 = vmul.f32 %v50, %v56
  %v59 = vmul.f32 %v51, %v56
  %v61 = vlaneseq
  %v62 = vshrl.u32 %v61, 7
  %v63 = vsub.s32 0, %v62
  %v64 = vrot.slane %v23, %v63
  %v66 = vadd.f32 %v58, %v64
  %v67 = vadd.f32 %v59, %v64
  %v68 = vld [vmem:[%s3] sm:$0xff]
  %v69 = vld [vmem:[%s3 + $0x8] sm:$0xff]
  %v70 = vld [vmem:[%s3 + $0x10] sm:$0xff]
  %v71 = vld [vmem:[%s3 + $0x18] sm:$0xff]
  %v72 = vld [vmem:[%s4] sm:$0x1]
  %v74 = vlaneseq
  %v75 = vshrl.u32 %v74, 7
  %v76 = vsub.s32 0, %v75
  %v77 = vrot.slane %v72, %v76
  %v80 = vsel %vm24, %v66, 0
  %v83 = vsel %vm24, %v67, 0
  %85 = vmatprep.subr.mxu0 0.0
  %86 = vmatpush1.msra.mxu0 %v68
  %87 = vmatprep.subr.mxu0 0.0
  %88 = vmatpush1.msra.mxu0 %v69
  %89 = vmatprep.subr.mxu0 0.0
  %90 = vmatpush1.msra.mxu0 %v70
  %91 = vmatprep.subr.mxu0 0.0
  %92 = vmatpush1.msra.mxu0 %v71
  %93 = vmatprep.subr.mxu0 0.0
  %94 = vmatpush1.msra.mxu0 0.0
  %95 = vmatprep.subr.mxu0 0.0
  %96 = vmatpush1.msra.mxu0 0.0
  %97 = vmatprep.subr.mxu0 0.0
  %98 = vmatpush1.msra.mxu0 0.0
  %99 = vmatprep.subr.mxu0 0.0
  %100 = vmatpush1.msra.mxu0 0.0
  %101 = vmatprep.subr.mxu0 0.0
  %102 = vmatpush1.msra.mxu0 0.0
  %103 = vmatprep.subr.mxu0 0.0
  %104 = vmatpush1.msra.mxu0 0.0
  %105 = vmatprep.subr.mxu0 0.0
  %106 = vmatpush1.msra.mxu0 0.0
  %107 = vmatprep.subr.mxu0 0.0
  %108 = vmatpush1.msra.mxu0 0.0
  %109 = vmatprep.subr.mxu0 0.0
  %110 = vmatpush1.msra.mxu0 0.0
  %111 = vmatprep.subr.mxu0 0.0
  %112 = vmatpush1.msra.mxu0 0.0
  %113 = vmatprep.subr.mxu0 0.0
  %114 = vmatpush1.msra.mxu0 0.0
  %115 = vmatprep.subr.mxu0 0.0
  %116 = vmatpush1.msra.mxu0 0.0
  %117 = vmatprep.subr.mxu0 0.0
  %118 = vmatpush1.msra.mxu0 0.0
  %119 = vmatprep.subr.mxu0 0.0
  %120 = vmatpush1.msra.mxu0 0.0
  %121 = vmatprep.subr.mxu0 0.0
  %122 = vmatpush1.msra.mxu0 0.0
  %123 = vmatprep.subr.mxu0 0.0
  %124 = vmatpush1.msra.mxu0 0.0
  %125 = vmatprep.subr.mxu0 0.0
  %126 = vmatpush1.msra.mxu0 0.0
  %127 = vmatprep.subr.mxu0 0.0
  %128 = vmatpush1.msra.mxu0 0.0
  %129 = vmatprep.subr.mxu0 0.0
  %130 = vmatpush1.msra.mxu0 0.0
  %131 = vmatprep.subr.mxu0 0.0
  %132 = vmatpush1.msra.mxu0 0.0
  %133 = vmatprep.subr.mxu0 0.0
  %134 = vmatpush1.msra.mxu0 0.0
  %135 = vmatprep.subr.mxu0 0.0
  %136 = vmatpush1.msra.mxu0 0.0
  %137 = vmatprep.subr.mxu0 0.0
  %138 = vmatpush1.msra.mxu0 0.0
  %139 = vmatprep.subr.mxu0 0.0
  %140 = vmatpush1.msra.mxu0 0.0
  %141 = vmatprep.subr.mxu0 0.0
  %142 = vmatpush1.msra.mxu0 0.0
  %143 = vmatprep.subr.mxu0 0.0
  %144 = vmatpush1.msra.mxu0 0.0
  %145 = vmatprep.subr.mxu0 0.0
  %146 = vmatpush1.msra.mxu0 0.0
  %147 = vmatprep.subr.mxu0 0.0
  %148 = vmatpush1.msra.mxu0 0.0
  %149 = vmatprep.mubr.f32.mxu0 0.0
  %150 = vmatmul.mubr.f32.gmra.mrb[0].mxu0 %v80
  %v151 = vpop.f32.mrb[0].mxu0
  %v152 = vadd.f32 %v77, %v151
  %v153 = vpop.f32.mrb[0].mxu0
  %154 = vmatprep.mubr.f32.mxu0 0.0
  %155 = vmatmul.mubr.f32.gmra.mrb[0].mxu0 %v83
  %v156 = vpop.f32.mrb[0].mxu0
  %v157 = vadd.f32 %v77, %v156
  %v158 = vpop.f32.mrb[0].mxu0
  %159 = vdwg.mxu0
  %v160 = vmul.f32 %v152, 0.5
  %v161 = vmul.f32 %v157, 0.5
  %v162 = vmul.f32 %v152, 0.70710677
  %v163 = vmul.f32 %v157, 0.70710677
  %v164 = vand.u32 2147483647, %v162
  %v165 = vand.u32 2147483647, %v163
  %v166 = vmul.f32 %v164, 0.3275911
  %v167 = vmul.f32 %v165, 0.3275911
  %v168 = vadd.f32 %v166, 1.0
  %v169 = vadd.f32 %v167, 1.0
  %v170 = vrcp.pop %v168
  %v171 = vmul.f32 1.0, %v170
  %v172 = vrcp.pop %v169
  %v173 = vmul.f32 1.0, %v172
  %v174 = vmul.f32 %v171, 1.0614054
  %v175 = vmul.f32 %v173, 1.0614054
  %v176 = vadd.f32 %v174, -1.4531521
  %v177 = vadd.f32 %v175, -1.4531521
  %v178 = vmul.f32 %v176, %v171
  %v179 = vmul.f32 %v177, %v173
  %v180 = vadd.f32 %v178, 1.4214138
  %v181 = vadd.f32 %v179, 1.4214138
  %v182 = vmul.f32 %v180, %v171
  %v183 = vmul.f32 %v181, %v173
  %v184 = vadd.f32 %v182, -0.28449672
  %v185 = vadd.f32 %v183, -0.28449672
  %v186 = vmul.f32 %v184, %v171
  %v187 = vmul.f32 %v185, %v173
  %v188 = vadd.f32 %v186, 0.2548296
  %v189 = vadd.f32 %v187, 0.2548296
  %v190 = vmul.f32 %v188, %v171
  %v191 = vmul.f32 %v189, %v173
  %v192 = vsub.f32 0.0, %v164
  %v193 = vsub.f32 0.0, %v165
  %v194 = vmul.f32 %v192, %v164
  %v195 = vmul.f32 %v193, %v165
  %v196 = vmul.f32 %v194, 1.442695
  %v197 = vpow.pop %v196
  %v198 = vmul.f32 %v195, 1.442695
  %v199 = vpow.pop %v198
  %v200 = vmul.f32 %v190, %v197
  %v201 = vmul.f32 %v191, %v199
  %v202 = vsub.f32 1.0, %v200
  %v203 = vsub.f32 1.0, %v201
  %vm204 = vcmp.ge.f32.partialorder %v162, 0.0
  %vm205 = vcmp.ge.f32.partialorder %v163, 0.0
  %v206 = vsub.f32 0.0, %v202
  %v207 = vsub.f32 0.0, %v203
  %v208 = vsel %vm204, %v202, %v206
  %v209 = vsel %vm205, %v203, %v207
  %v210 = vadd.f32 %v208, 1.0
  %v211 = vadd.f32 %v209, 1.0
  %v212 = vmul.f32 %v160, %v210
  %v213 = vmul.f32 %v161, %v211
  %214 = vst [vmem:[%s5] sm:$0xff] %v212
  %215 = vst [vmem:[%s5 + $0x8] sm:$0xff] %v213
  // Predicated region
  $region22: #{block_forward.8} parent=0 // pred_check
    _
  $region23: #{block_forward.8} parent=0 // pred_check_branch
    %217 = sbr.rel (0) target = $region25
  $region24: #{block_forward.8} parent=0 // pred_region
    _
  $region25: #{block_forward.8} parent=0 // pred_fallthru
    _
  // Predicated region
  $region26: #{block_forward.8} parent=0 // pred_check
    _
  $region27: #{block_forward.8} parent=0 // pred_check_branch
    %219 = sbr.rel (0) target = $region29
  $region28: #{block_forward.8} parent=0 // pred_region
    _
  $region29: #{block_forward.8} parent=0 // pred_fallthru
    _

// kernel: block_forward.6
$region0: #{block_forward.6}
  #allocation0 [shape = 'u32[]', space=smem, size = 0x4, offset = 0x4, fixed_abs, tag = 'smem constant byte address 0x4 - core index']
  #allocation1 [shape = 'u32[144,128]{1,0:T(1,128)}', space=vmem, size = 0x12000, scoped, tag = 'internal scratch']
  %s0 = inlined_call_operand.vmem [shape: f32[2,8,96], index: 0, kind: input, shape index: {}]
  %s1 = inlined_call_operand.vmem [shape: f32[2,8,32], index: 1, kind: output, shape index: {}]
  %s2 = sld [smem:[#allocation0]]
  $region37: #{block_forward.6} parent=0
    _
  %s4 = ssub.s32 1, %s2
  %s5 = scalar_select 0, %s4, %s2
  loop: start=0, step=1, limit=4
  $region2: #{block_forward.6} parent=0 // loop_pre_header
    _
  $region3: #{block_forward.6} parent=0 // loop_header
    %s7 = sphi 0, %s11
    %p8 = scmp.ge.s32.totalorder %s7, 4
    %s17 = sphi 0, %s19
    %s20 = sphi 0, %s17
    %s21 = sphi 0, %s20
    %s37 = sphi 0, %s21
    %s43 = sphi 0, %s45
    %s46 = sphi 0, %s43
    %s47 = sphi 0, %s46
    %s63 = sphi 0, %s47
  $region4: #{block_forward.6} parent=0 // loop_header_branch
    %10 = sbr.rel (%p8) target = $region8
  $region5: #{block_forward.6} parent=0 // loop_body
    %s12 = ssub.s32 %s7, 1
    %s13 = ssub.s32 %s7, 2
    %s14 = sadd.s32 %s7, 1
    %s15 = ssub.s32 %s7, %s14
    %p16 = scmp.eq.s32.totalorder %s15, 0
    %s18 = sadd.s32 %s17, 1
    %s19 = scalar_select %p16, %s17, %s18
    %p22 = pneg %p16
    %p23 = scmp.eq.s32.totalorder %s7, 1
    %p24 = por %p22, %p23
    %p25 = scmp.ne.s32.totalorder %s17, %s20
    %p26 = scmp.eq.s32.totalorder %s7, 0
    %p27 = por %p25, %p26
    %p28 = scmp.ne.s32.totalorder %s17, %s20
    %p29 = scmp.eq.s32.totalorder %s12, 1
    %p30 = por %p28, %p29
    %p31 = scmp.ne.s32.totalorder %s20, %s21
    %p32 = scmp.eq.s32.totalorder %s12, 0
    %p33 = por %p31, %p32
    %p34 = scmp.ne.s32.totalorder %s20, %s21
    %p35 = scmp.eq.s32.totalorder %s13, 1
    %p36 = por %p34, %p35
    %p38 = scmp.ne.s32.totalorder %s21, %s37
    %p39 = scmp.eq.s32.totalorder %s13, 0
    %p40 = por %p38, %p39
    %s41 = ssub.s32 %s7, %s14
    %p42 = scmp.eq.s32.totalorder %s41, 0
    %s44 = sadd.s32 %s43, 1
    %s45 = scalar_select %p42, %s43, %s44
    %p48 = pneg %p42
    %p49 = scmp.eq.s32.totalorder %s7, 1
    %p50 = por %p48, %p49
    %p51 = scmp.ne.s32.totalorder %s43, %s46
    %p52 = scmp.eq.s32.totalorder %s7, 0
    %p53 = por %p51, %p52
    %p54 = scmp.ne.s32.totalorder %s43, %s46
    %p55 = scmp.eq.s32.totalorder %s12, 1
    %p56 = por %p54, %p55
    %p57 = scmp.ne.s32.totalorder %s46, %s47
    %p58 = scmp.eq.s32.totalorder %s12, 0
    %p59 = por %p57, %p58
    %p60 = scmp.ne.s32.totalorder %s46, %s47
    %p61 = scmp.eq.s32.totalorder %s13, 1
    %p62 = por %p60, %p61
    %p64 = scmp.ne.s32.totalorder %s47, %s63
    %p65 = scmp.eq.s32.totalorder %s13, 0
    %p66 = por %p64, %p65
    %p67 = scmp.le.s32.totalorder 1, %s7
    %p68 = scmp.lt.s32.totalorder %s7, 3
    %p69 = pnand %p67, %p68
    %p70 = pneg %p69
    // Predicated region
    $region9: #{block_forward.6} parent=5 // pred_check
      _
    $region10: #{block_forward.6} parent=5 // pred_check_branch
      %72 = sbr.rel (%p69) target = $region12
    $region11: #{block_forward.6} parent=5 // pred_region
      %s73 = ssub.s32 %s7, 1
    $region12: #{block_forward.6} parent=5 // pred_fallthru
      _
    %p74 = scmp.lt.s32.totalorder %s7, 2
    // Predicated region
    $region13: #{block_forward.6} parent=5 // pred_check
      %p75 = pneg %p74
    $region14: #{block_forward.6} parent=5 // pred_check_branch
      %77 = sbr.rel (%p75) target = $region16
    $region15: #{block_forward.6} parent=5 // pred_region
      // Predicated region
      $region17: #{block_forward.6} parent=15 // pred_check
        %p78 = pneg %p27
      $region18: #{block_forward.6} parent=15 // pred_check_branch
        %80 = sbr.rel (%p78) target = $region20
      $region19: #{block_forward.6} parent=15 // pred_region
        %p81 = scmp.lt.s32.totalorder %s7, 1
        %s82 = scalar_select %p81, %s7, 1
        %s83 = smul.addr %s82, 8
        %s84 = scalar_lea.vmem %s0, %s83
      $region20: #{block_forward.6} parent=15 // pred_fallthru
        _
    $region16: #{block_forward.6} parent=5 // pred_fallthru
      _
    %p85 = scmp.le.s32.totalorder 1, %s7
    %p86 = scmp.lt.s32.totalorder %s7, 3
    %p87 = pnand %p85, %p86
    %p88 = pneg %p87
    // Predicated region
    $region21: #{block_forward.6} parent=5 // pred_check
      _
    $region22: #{block_forward.6} parent=5 // pred_check_branch
      %90 = sbr.rel (%p87) target = $region24
    $region23: #{block_forward.6} parent=5 // pred_region
      %s91 = ssub.s32 %s7, 1
      %p92 = scmp.lt.s32.totalorder %s12, 1
      %s93 = scalar_select %p92, %s12, 1
      %s94 = smul.addr %s93, 8
      %s95 = scalar_lea.vmem %s0, %s94
      %p96 = pneg %p33
      %p97 = pneg %p30
      %p98 = pneg %p59
      %p99 = pneg %p56
      %p100 = scmp.lt.s32.totalorder %s12, 1
      %s101 = scalar_select %p100, %s12, 1
      %s102 = smul.addr %s101, 8
      %s103 = scalar_lea.vmem %s1, %s102
      %p104 = scmp.lt.s32.totalorder %s12, 1
      %s105 = scalar_select %p104, %s12, 1
      %s106 = smul.addr %s105, 8
      %s107 = scalar_lea.vmem %s0, %s106
      %p108 = scmp.lt.s32.totalorder %s12, 1
      %s109 = scalar_select %p108, %s12, 1
      %s110 = smul.addr %s109, 8
      %s111 = scalar_lea.vmem %s1, %s110
      %v112 = vld [vmem:[%s107] sm:$0xff]
      %114 = vrot.lane.b32.xlu0 %v112, 96
      %v115 = vpop.permute.xlu0 %114
      %vm116 = vcmask 64512
      %v117 = vsel %vm116, %v112, 0
      %v119 = vsel %vm116, %v115, 0
      %121 = vmatprep.subr.mxu0 0.0
      %122 = vmatpush1.xpose.msra.mxu0 %v119
      %123 = vmatprep.subr.mxu0 0.0
      %124 = vmatpush1.xpose.msra.mxu0 0.0
      %125 = vmatprep.subr.mxu0 0.0
      %126 = vmatpush1.xpose.msra.mxu0 0.0
      %127 = vmatprep.subr.mxu0 0.0
      %128 = vmatpush1.xpose.msra.mxu0 0.0
      %129 = vmatprep.subr.mxu0 0.0
      %130 = vmatpush1.xpose.msra.mxu0 0.0
      %131 = vmatprep.subr.mxu0 0.0
      %132 = vmatpush1.xpose.msra.mxu0 0.0
      %133 = vmatprep.subr.mxu0 0.0
      %134 = vmatpush1.xpose.msra.mxu0 0.0
      %135 = vmatprep.subr.mxu0 0.0
      %136 = vmatpush1.xpose.msra.mxu0 0.0
      %137 = vmatprep.subr.mxu0 0.0
      %138 = vmatpush1.xpose.msra.mxu0 0.0
      %139 = vmatprep.subr.mxu0 0.0
      %140 = vmatpush1.xpose.msra.mxu0 0.0
      %141 = vmatprep.subr.mxu0 0.0
      %142 = vmatpush1.xpose.msra.mxu0 0.0
      %143 = vmatprep.subr.mxu0 0.0
      %144 = vmatpush1.xpose.msra.mxu0 0.0
      %145 = vmatprep.subr.mxu0 0.0
      %146 = vmatpush1.xpose.msra.mxu0 0.0
      %147 = vmatprep.subr.mxu0 0.0
      %148 = vmatpush1.xpose.msra.mxu0 0.0
      %149 = vmatprep.subr.mxu0 0.0
      %150 = vmatpush1.xpose.msra.mxu0 0.0
      %151 = vmatprep.subr.mxu0 0.0
      %152 = vmatpush1.xpose.msra.mxu0 0.0
      %153 = vmatprep.subr.mxu0 0.0
      %154 = vmatpush1.xpose.msra.mxu0 0.0
      %155 = vmatprep.subr.mxu0 0.0
      %156 = vmatpush1.xpose.msra.mxu0 0.0
      %157 = vmatprep.subr.mxu0 0.0
      %158 = vmatpush1.xpose.msra.mxu0 0.0
      %159 = vmatprep.subr.mxu0 0.0
      %160 = vmatpush1.xpose.msra.mxu0 0.0
      %161 = vmatprep.subr.mxu0 0.0
      %162 = vmatpush1.xpose.msra.mxu0 0.0
      %163 = vmatprep.subr.mxu0 0.0
      %164 = vmatpush1.xpose.msra.mxu0 0.0
      %165 = vmatprep.subr.mxu0 0.0
      %166 = vmatpush1.xpose.msra.mxu0 0.0
      %167 = vmatprep.subr.mxu0 0.0
      %168 = vmatpush1.xpose.msra.mxu0 0.0
      %169 = vmatprep.subr.mxu0 0.0
      %170 = vmatpush1.xpose.msra.mxu0 0.0
      %171 = vmatprep.subr.mxu0 0.0
      %172 = vmatpush1.xpose.msra.mxu0 0.0
      %173 = vmatprep.subr.mxu0 0.0
      %174 = vmatpush1.xpose.msra.mxu0 0.0
      %175 = vmatprep.subr.mxu0 0.0
      %176 = vmatpush1.xpose.msra.mxu0 0.0
      %177 = vmatprep.subr.mxu0 0.0
      %178 = vmatpush1.xpose.msra.mxu0 0.0
      %179 = vmatprep.subr.mxu0 0.0
      %180 = vmatpush1.xpose.msra.mxu0 0.0
      %181 = vmatprep.subr.mxu0 0.0
      %182 = vmatpush1.xpose.msra.mxu0 0.0
      %183 = vmatprep.subr.mxu0 0.0
      %184 = vmatpush1.xpose.msra.mxu0 0.0
      %185 = vmatprep.mubr.f32.mxu0 0.0
      %186 = vmatmul.mubr.f32.gmra.mrb[0].mxu0 %v117
      %v187 = vpop.f32.mrb[0].mxu0
      %v188 = vadd.f32 0.0, %v187
      %v189 = vpop.f32.mrb[0].mxu0
      %190 = vdwg.mxu0
      %v191 = vmul.f32 %v188, 0.35355338
      %v192 = vsel %vm116, %v191, -inf
      %193 = vmax.xlane.f32.xlu0 %v192
      %v194 = vpop.xlane.xlu0 %193
      %v195 = vsub.f32 %v191, %v194
      %v196 = vmul.f32 %v195, 1.442695
      %v197 = vpow.pop %v196
      %v198 = vsel %vm116, %v197, 0.0
      %199 = vadd.xlane.f32.xlu0 %v198
      %v200 = vpop.xlane.xlu0 %199
      %v201 = vrcp.pop %v200
      %v202 = vmul.f32 %v197, %v201
      %203 = vrot.lane.b32.xlu0 %v112, 64
      %v204 = vpop.permute.xlu0 %203
      %v207 = vsel %vm116, %v202, 0
      %209 = vmatprep.subr.mxu0 0.0
      %210 = vmatpush1.msra.mxu0 %v204
      %211 = vmatprep.subr.mxu0 0.0
      %212 = vmatpush1.msra.mxu0 0.0
      %213 = vmatprep.subr.mxu0 0.0
      %214 = vmatpush1.msra.mxu0 0.0
      %215 = vmatprep.subr.mxu0 0.0
      %216 = vmatpush1.msra.mxu0 0.0
      %217 = vmatprep.subr.mxu0 0.0
      %218 = vmatpush1.msra.mxu0 0.0
      %219 = vmatprep.subr.mxu0 0.0
      %220 = vmatpush1.msra.mxu0 0.0
      %221 = vmatprep.subr.mxu0 0.0
      %222 = vmatpush1.msra.mxu0 0.0
      %223 = vmatprep.subr.mxu0 0.0
      %224 = vmatpush1.msra.mxu0 0.0
      %225 = vmatprep.subr.mxu0 0.0
      %226 = vmatpush1.msra.mxu0 0.0
      %227 = vmatprep.subr.mxu0 0.0
      %228 = vmatpush1.msra.mxu0 0.0
      %229 = vmatprep.subr.mxu0 0.0
      %230 = vmatpush1.msra.mxu0 0.0
      %231 = vmatprep.subr.mxu0 0.0
      %232 = vmatpush1.msra.mxu0 0.0
      %233 = vmatprep.subr.mxu0 0.0
      %234 = vmatpush1.msra.mxu0 0.0
      %235 = vmatprep.subr.mxu0 0.0
      %236 = vmatpush1.msra.mxu0 0.0
      %237 = vmatprep.subr.mxu0 0.0
      %238 = vmatpush1.msra.mxu0 0.0
      %239 = vmatprep.subr.mxu0 0.0
      %240 = vmatpush1.msra.mxu0 0.0
      %241 = vmatprep.subr.mxu0 0.0
      %242 = vmatpush1.msra.mxu0 0.0
      %243 = vmatprep.subr.mxu0 0.0
      %244 = vmatpush1.msra.mxu0 0.0
      %245 = vmatprep.subr.mxu0 0.0
      %246 = vmatpush1.msra.mxu0 0.0
      %247 = vmatprep.subr.mxu0 0.0
      %248 = vmatpush1.msra.mxu0 0.0
      %249 = vmatprep.subr.mxu0 0.0
      %250 = vmatpush1.msra.mxu0 0.0
      %251 = vmatprep.subr.mxu0 0.0
      %252 = vmatpush1.msra.mxu0 0.0
      %253 = vmatprep.subr.mxu0 0.0
      %254 = vmatpush1.msra.mxu0 0.0
      %255 = vmatprep.subr.mxu0 0.0
      %256 = vmatpush1.msra.mxu0 0.0
      %257 = vmatprep.subr.mxu0 0.0
      %258 = vmatpush1.msra.mxu0 0.0
      %259 = vmatprep.subr.mxu0 0.0
      %260 = vmatpush1.msra.mxu0 0.0
      %261 = vmatprep.subr.mxu0 0.0
      %262 = vmatpush1.msra.mxu0 0.0
      %263 = vmatprep.subr.mxu0 0.0
      %264 = vmatpush1.msra.mxu0 0.0
      %265 = vmatprep.subr.mxu0 0.0
      %266 = vmatpush1.msra.mxu0 0.0
      %267 = vmatprep.subr.mxu0 0.0
      %268 = vmatpush1.msra.mxu0 0.0
      %269 = vmatprep.subr.mxu0 0.0
      %270 = vmatpush1.msra.mxu0 0.0
      %271 = vmatprep.subr.mxu0 0.0
      %272 = vmatpush1.msra.mxu0 0.0
      %273 = vmatprep.mubr.f32.mxu0 0.0
      %274 = vmatmul.mubr.f32.gmra.mrb[0].mxu0 %v207
      %v275 = vpop.f32.mrb[0].mxu0
      %v276 = vadd.f32 0.0, %v275
      %v277 = vpop.f32.mrb[0].mxu0
      %278 = vdwg.mxu0
      %279 = vrot.lane.b32.xlu0 %v112, 120
      %v280 = vpop.permute.xlu0 %279
      %281 = vrot.lane.b32.xlu0 %v112, 88
      %v282 = vpop.permute.xlu0 %281
      %v283 = vsel %vm116, %v280, 0
      %v285 = vsel %vm116, %v282, 0
      %287 = vmatprep.subr.mxu0 0.0
      %288 = vmatpush1.xpose.msra.mxu0 %v285
      %289 = vmatprep.subr.mxu0 0.0
      %290 = vmatpush1.xpose.msra.mxu0 0.0
      %291 = vmatprep.subr.mxu0 0.0
      %292 = vmatpush1.xpose.msra.mxu0 0.0
      %293 = vmatprep.subr.mxu0 0.0
      %294 = vmatpush1.xpose.msra.mxu0 0.0
      %295 = vmatprep.subr.mxu0 0.0
      %296 = vmatpush1.xpose.msra.mxu0 0.0
      %297 = vmatprep.subr.mxu0 0.0
      %298 = vmatpush1.xpose.msra.mxu0 0.0
      %299 = vmatprep.subr.mxu0 0.0
      %300 = vmatpush1.xpose.msra.mxu0 0.0
      %301 = vmatprep.subr.mxu0 0.0
      %302 = vmatpush1.xpose.msra.mxu0 0.0
      %303 = vmatprep.subr.mxu0 0.0
      %304 = vmatpush1.xpose.msra.mxu0 0.0
      %305 = vmatprep.subr.mxu0 0.0
      %306 = vmatpush1.xpose.msra.mxu0 0.0
      %307 = vmatprep.subr.mxu0 0.0
      %308 = vmatpush1.xpose.msra.mxu0 0.0
      %309 = vmatprep.subr.mxu0 0.0
      %310 = vmatpush1.xpose.msra.mxu0 0.0
      %311 = vmatprep.subr.mxu0 0.0
      %312 = vmatpush1.xpose.msra.mxu0 0.0
      %313 = vmatprep.subr.mxu0 0.0
      %314 = vmatpush1.xpose.msra.mxu0 0.0
      %315 = vmatprep.subr.mxu0 0.0
      %316 = vmatpush1.xpose.msra.mxu0 0.0
      %317 = vmatprep.subr.mxu0 0.0
      %318 = vmatpush1.xpose.msra.mxu0 0.0
      %319 = vmatprep.subr.mxu0 0.0
      %320 = vmatpush1.xpose.msra.mxu0 0.0
      %321 = vmatprep.subr.mxu0 0.0
      %322 = vmatpush1.xpose.msra.mxu0 0.0
      %323 = vmatprep.subr.mxu0 0.0
      %324 = vmatpush1.xpose.msra.mxu0 0.0
      %325 = vmatprep.subr.mxu0 0.0
      %326 = vmatpush1.xpose.msra.mxu0 0.0
      %327 = vmatprep.subr.mxu0 0.0
      %328 = vmatpush1.xpose.msra.mxu0 0.0
      %329 = vmatprep.subr.mxu0 0.0
      %330 = vmatpush1.xpose.msra.mxu0 0.0
      %331 = vmatprep.subr.mxu0 0.0
      %332 = vmatpush1.xpose.msra.mxu0 0.0
      %333 = vmatprep.subr.mxu0 0.0
      %334 = vmatpush1.xpose.msra.mxu0 0.0
      %335 = vmatprep.subr.mxu0 0.0
      %336 = vmatpush1.xpose.msra.mxu0 0.0
      %337 = vmatprep.subr.mxu0 0.0
      %338 = vmatpush1.xpose.msra.mxu0 0.0
      %339 = vmatprep.subr.mxu0 0.0
      %340 = vmatpush1.xpose.msra.mxu0 0.0
      %341 = vmatprep.subr.mxu0 0.0
      %342 = vmatpush1.xpose.msra.mxu0 0.0
      %343 = vmatprep.subr.mxu0 0.0
      %344 = vmatpush1.xpose.msra.mxu0 0.0
      %345 = vmatprep.subr.mxu0 0.0
      %346 = vmatpush1.xpose.msra.mxu0 0.0
      %347 = vmatprep.subr.mxu0 0.0
      %348 = vmatpush1.xpose.msra.mxu0 0.0
      %349 = vmatprep.subr.mxu0 0.0
      %350 = vmatpush1.xpose.msra.mxu0 0.0
      %351 = vmatprep.mubr.f32.mxu0 0.0
      %352 = vmatmul.mubr.f32.gmra.mrb[0].mxu0 %v283
      %v353 = vpop.f32.mrb[0].mxu0
      %v354 = vadd.f32 0.0, %v353
      %v355 = vpop.f32.mrb[0].mxu0
      %356 = vdwg.mxu0
      %v357 = vmul.f32 %v354, 0.35355338
      %v358 = vsel %vm116, %v357, -inf
      %359 = vmax.xlane.f32.xlu0 %v358
      %v360 = vpop.xlane.xlu0 %359
      %v361 = vsub.f32 %v357, %v360
      %v362 = vmul.f32 %v361, 1.442695
      %v363 = vpow.pop %v362
      %v364 = vsel %vm116, %v363, 0.0
      %365 = vadd.xlane.f32.xlu0 %v364
      %v366 = vpop.xlane.xlu0 %365
      %v367 = vrcp.pop %v366
      %v368 = vmul.f32 %v363, %v367
      %369 = vrot.lane.b32.xlu0 %v112, 56
      %v370 = vpop.permute.xlu0 %369
      %v373 = vsel %vm116, %v368, 0
      %375 = vmatprep.subr.mxu0 0.0
      %376 = vmatpush1.msra.mxu0 %v370
      %377 = vmatprep.subr.mxu0 0.0
      %378 = vmatpush1.msra.mxu0 0.0
      %379 = vmatprep.subr.mxu0 0.0
      %380 = vmatpush1.msra.mxu0 0.0
      %381 = vmatprep.subr.mxu0 0.0
      %382 = vmatpush1.msra.mxu0 0.0
      %383 = vmatprep.subr.mxu0 0.0
      %384 = vmatpush1.msra.mxu0 0.0
      %385 = vmatprep.subr.mxu0 0.0
      %386 = vmatpush1.msra.mxu0 0.0
      %387 = vmatprep.subr.mxu0 0.0
      %388 = vmatpush1.msra.mxu0 0.0
      %389 = vmatprep.subr.mxu0 0.0
      %390 = vmatpush1.msra.mxu0 0.0
      %391 = vmatprep.subr.mxu0 0.0
      %392 = vmatpush1.msra.mxu0 0.0
      %393 = vmatprep.subr.mxu0 0.0
      %394 = vmatpush1.msra.mxu0 0.0
      %395 = vmatprep.subr.mxu0 0.0
      %396 = vmatpush1.msra.mxu0 0.0
      %397 = vmatprep.subr.mxu0 0.0
      %398 = vmatpush1.msra.mxu0 0.0
      %399 = vmatprep.subr.mxu0 0.0
      %400 = vmatpush1.msra.mxu0 0.0
      %401 = vmatprep.subr.mxu0 0.0
      %402 = vmatpush1.msra.mxu0 0.0
      %403 = vmatprep.subr.mxu0 0.0
      %404 = vmatpush1.msra.mxu0 0.0
      %405 = vmatprep.subr.mxu0 0.0
      %406 = vmatpush1.msra.mxu0 0.0
      %407 = vmatprep.subr.mxu0 0.0
      %408 = vmatpush1.msra.mxu0 0.0
      %409 = vmatprep.subr.mxu0 0.0
      %410 = vmatpush1.msra.mxu0 0.0
      %411 = vmatprep.subr.mxu0 0.0
      %412 = vmatpush1.msra.mxu0 0.0
      %413 = vmatprep.subr.mxu0 0.0
      %414 = vmatpush1.msra.mxu0 0.0
      %415 = vmatprep.subr.mxu0 0.0
      %416 = vmatpush1.msra.mxu0 0.0
      %417 = vmatprep.subr.mxu0 0.0
      %418 = vmatpush1.msra.mxu0 0.0
      %419 = vmatprep.subr.mxu0 0.0
      %420 = vmatpush1.msra.mxu0 0.0
      %421 = vmatprep.subr.mxu0 0.0
      %422 = vmatpush1.msra.mxu0 0.0
      %423 = vmatprep.subr.mxu0 0.0
      %424 = vmatpush1.msra.mxu0 0.0
      %425 = vmatprep.subr.mxu0 0.0
      %426 = vmatpush1.msra.mxu0 0.0
      %427 = vmatprep.subr.mxu0 0.0
      %428 = vmatpush1.msra.mxu0 0.0
      %429 = vmatprep.subr.mxu0 0.0
      %430 = vmatpush1.msra.mxu0 0.0
      %431 = vmatprep.subr.mxu0 0.0
      %432 = vmatpush1.msra.mxu0 0.0
      %433 = vmatprep.subr.mxu0 0.0
      %434 = vmatpush1.msra.mxu0 0.0
      %435 = vmatprep.subr.mxu0 0.0
      %436 = vmatpush1.msra.mxu0 0.0
      %437 = vmatprep.subr.mxu0 0.0
      %438 = vmatpush1.msra.mxu0 0.0
      %439 = vmatprep.mubr.f32.mxu0 0.0
      %440 = vmatmul.mubr.f32.gmra.mrb[0].mxu0 %v373
      %v441 = vpop.f32.mrb[0].mxu0
      %v442 = vadd.f32 0.0, %v441
      %v443 = vpop.f32.mrb[0].mxu0
      %444 = vdwg.mxu0
      %445 = vrot.lane.b32.xlu0 %v112, 112
      %v446 = vpop.permute.xlu0 %445
      %447 = vrot.lane.b32.xlu0 %v112, 80
      %v448 = vpop.permute.xlu0 %447
      %v449 = vsel %vm116, %v446, 0
      %v451 = vsel %vm116, %v448, 0
      %453 = vmatprep.subr.mxu0 0.0
      %454 = vmatpush1.xpose.msra.mxu0 %v451
      %455 = vmatprep.subr.mxu0 0.0
      %456 = vmatpush1.xpose.msra.mxu0 0.0
      %457 = vmatprep.subr.mxu0 0.0
      %458 = vmatpush1.xpose.msra.mxu0 0.0
      %459 = vmatprep.subr.mxu0 0.0
      %460 = vmatpush1.xpose.msra.mxu0 0.0
      %461 = vmatprep.subr.mxu0 0.0
      %462 = vmatpush1.xpose.msra.mxu0 0.0
      %463 = vmatprep.subr.mxu0 0.0
      %464 = vmatpush1.xpose.msra.mxu0 0.0
      %465 = vmatprep.subr.mxu0 0.0
      %466 = vmatpush1.xpose.msra.mxu0 0.0
      %467 = vmatprep.subr.mxu0 0.0
      %468 = vmatpush1.xpose.msra.mxu0 0.0
      %469 = vmatprep.subr.mxu0 0.0
      %470 = vmatpush1.xpose.msra.mxu0 0.0
      %471 = vmatprep.subr.mxu0 0.0
      %472 = vmatpush1.xpose.msra.mxu0 0.0
      %473 = vmatprep.subr.mxu0 0.0
      %474 = vmatpush1.xpose.msra.mxu0 0.0
      %475 = vmatprep.subr.mxu0 0.0
      %476 = vmatpush1.xpose.msra.mxu0 0.0
      %477 = vmatprep.subr.mxu0 0.0
      %478 = vmatpush1.xpose.msra.mxu0 0.0
      %479 = vmatprep.subr.mxu0 0.0
      %480 = vmatpush1.xpose.msra.mxu0 0.0
      %481 = vmatprep.subr.mxu0 0.0
      %482 = vmatpush1.xpose.msra.mxu0 0.0
      %483 = vmatprep.subr.mxu0 0.0
      %484 = vmatpush1.xpose.msra.mxu0 0.0
      %485 = vmatprep.subr.mxu0 0.0
      %486 = vmatpush1.xpose.msra.mxu0 0.0
      %487 = vmatprep.subr.mxu0 0.0
      %488 = vmatpush1.xpose.msra.mxu0 0.0
      %489 = vmatprep.subr.mxu0 0.0
      %490 = vmatpush1.xpose.msra.mxu0 0.0
      %491 = vmatprep.subr.mxu0 0.0
      %492 = vmatpush1.xpose.msra.mxu0 0.0
      %493 = vmatprep.subr.mxu0 0.0
      %494 = vmatpush1.xpose.msra.mxu0 0.0
      %495 = vmatprep.subr.mxu0 0.0
      %496 = vmatpush1.xpose.msra.mxu0 0.0
      %497 = vmatprep.subr.mxu0 0.0
      %498 = vmatpush1.xpose.msra.mxu0 0.0
      %499 = vmatprep.subr.mxu0 0.0
      %500 = vmatpush1.xpose.msra.mxu0 0.0
      %501 = vmatprep.subr.mxu0 0.0
      %502 = vmatpush1.xpose.msra.mxu0 0.0
      %503 = vmatprep.subr.mxu0 0.0
      %504 = vmatpush1.xpose.msra.mxu0 0.0
      %505 = vmatprep.subr.mxu0 0.0
      %506 = vmatpush1.xpose.msra.mxu0 0.0
      %507 = vmatprep.subr.mxu0 0.0
      %508 = vmatpush1.xpose.msra.mxu0 0.0
      %509 = vmatprep.subr.mxu0 0.0
      %510 = vmatpush1.xpose.msra.mxu0 0.0
      %511 = vmatprep.subr.mxu0 0.0
      %512 = vmatpush1.xpose.msra.mxu0 0.0
      %513 = vmatprep.subr.mxu0 0.0
      %514 = vmatpush1.xpose.msra.mxu0 0.0
      %515 = vmatprep.subr.mxu0 0.0
      %516 = vmatpush1.xpose.msra.mxu0 0.0
      %517 = vmatprep.mubr.f32.mxu0 0.0
      %518 = vmatmul.mubr.f32.gmra.mrb[0].mxu0 %v449
      %v519 = vpop.f32.mrb[0].mxu0
      %v520 = vadd.f32 0.0, %v519
      %v521 = vpop.f32.mrb[0].mxu0
      %522 = vdwg.mxu0
      %v523 = vmul.f32 %v520, 0.35355338
      %v524 = vsel %vm116, %v523, -inf
      %525 = vmax.xlane.f32.xlu0 %v524
      %v526 = vpop.xlane.xlu0 %525
      %v527 = vsub.f32 %v523, %v526
      %v528 = vmul.f32 %v527, 1.442695
      %v529 = vpow.pop %v528
      %v530 = vsel %vm116, %v529, 0.0
      %531 = vadd.xlane.f32.xlu0 %v530
      %v532 = vpop.xlane.xlu0 %531
      %v533 = vrcp.pop %v532
      %v534 = vmul.f32 %v529, %v533
      %535 = vrot.lane.b32.xlu0 %v112, 48
      %v536 = vpop.permute.xlu0 %535
      %v539 = vsel %vm116, %v534, 0
      %541 = vmatprep.subr.mxu0 0.0
      %542 = vmatpush1.msra.mxu0 %v536
      %543 = vmatprep.subr.mxu0 0.0
      %544 = vmatpush1.msra.mxu0 0.0
      %545 = vmatprep.subr.mxu0 0.0
      %546 = vmatpush1.msra.mxu0 0.0
      %547 = vmatprep.subr.mxu0 0.0
      %548 = vmatpush1.msra.mxu0 0.0
      %549 = vmatprep.subr.mxu0 0.0
      %550 = vmatpush1.msra.mxu0 0.0
      %551 = vmatprep.subr.mxu0 0.0
      %552 = vmatpush1.msra.mxu0 0.0
      %553 = vmatprep.subr.mxu0 0.0
      %554 = vmatpush1.msra.mxu0 0.0
      %555 = vmatprep.subr.mxu0 0.0
      %556 = vmatpush1.msra.mxu0 0.0
      %557 = vmatprep.subr.mxu0 0.0
      %558 = vmatpush1.msra.mxu0 0.0
      %559 = vmatprep.subr.mxu0 0.0
      %560 = vmatpush1.msra.mxu0 0.0
      %561 = vmatprep.subr.mxu0 0.0
      %562 = vmatpush1.msra.mxu0 0.0
      %563 = vmatprep.subr.mxu0 0.0
      %564 = vmatpush1.msra.mxu0 0.0
      %565 = vmatprep.subr.mxu0 0.0
      %566 = vmatpush1.msra.mxu0 0.0
      %567 = vmatprep.subr.mxu0 0.0
      %568 = vmatpush1.msra.mxu0 0.0
      %569 = vmatprep.subr.mxu0 0.0
      %570 = vmatpush1.msra.mxu0 0.0
      %571 = vmatprep.subr.mxu0 0.0
      %572 = vmatpush1.msra.mxu0 0.0
      %573 = vmatprep.subr.mxu0 0.0
      %574 = vmatpush1.msra.mxu0 0.0
      %575 = vmatprep.subr.mxu0 0.0
      %576 = vmatpush1.msra.mxu0 0.0
      %577 = vmatprep.subr.mxu0 0.0
      %578 = vmatpush1.msra.mxu0 0.0
      %579 = vmatprep.subr.mxu0 0.0
      %580 = vmatpush1.msra.mxu0 0.0
      %581 = vmatprep.subr.mxu0 0.0
      %582 = vmatpush1.msra.mxu0 0.0
      %583 = vmatprep.subr.mxu0 0.0
      %584 = vmatpush1.msra.mxu0 0.0
      %585 = vmatprep.subr.mxu0 0.0
      %586 = vmatpush1.msra.mxu0 0.0
      %587 = vmatprep.subr.mxu0 0.0
      %588 = vmatpush1.msra.mxu0 0.0
      %589 = vmatprep.subr.mxu0 0.0
      %590 = vmatpush1.msra.mxu0 0.0
      %591 = vmatprep.subr.mxu0 0.0
      %592 = vmatpush1.msra.mxu0 0.0
      %593 = vmatprep.subr.mxu0 0.0
      %594 = vmatpush1.msra.mxu0 0.0
      %595 = vmatprep.subr.mxu0 0.0
      %596 = vmatpush1.msra.mxu0 0.0
      %597 = vmatprep.subr.mxu0 0.0
      %598 = vmatpush1.msra.mxu0 0.0
      %599 = vmatprep.subr.mxu0 0.0
      %600 = vmatpush1.msra.mxu0 0.0
      %601 = vmatprep.subr.mxu0 0.0
      %602 = vmatpush1.msra.mxu0 0.0
      %603 = vmatprep.subr.mxu0 0.0
      %604 = vmatpush1.msra.mxu0 0.0
      %605 = vmatprep.mubr.f32.mxu0 0.0
      %606 = vmatmul.mubr.f32.gmra.mrb[0].mxu0 %v539
      %v607 = vpop.f32.mrb[0].mxu0
      %v608 = vadd.f32 0.0, %v607
      %v609 = vpop.f32.mrb[0].mxu0
      %610 = vdwg.mxu0
      %611 = vrot.lane.b32.xlu0 %v112, 104
      %v612 = vpop.permute.xlu0 %611
      %613 = vrot.lane.b32.xlu0 %v112, 72
      %v614 = vpop.permute.xlu0 %613
      %v615 = vsel %vm116, %v612, 0
      %v617 = vsel %vm116, %v614, 0
      %619 = vmatprep.subr.mxu0 0.0
      %620 = vmatpush1.xpose.msra.mxu0 %v617
      %621 = vmatprep.subr.mxu0 0.0
      %622 = vmatpush1.xpose.msra.mxu0 0.0
      %623 = vmatprep.subr.mxu0 0.0
      %624 = vmatpush1.xpose.msra.mxu0 0.0
      %625 = vmatprep.subr.mxu0 0.0
      %626 = vmatpush1.xpose.msra.mxu0 0.0
      %627 = vmatprep.subr.mxu0 0.0
      %628 = vmatpush1.xpose.msra.mxu0 0.0
      %629 = vmatprep.subr.mxu0 0.0
      %630 = vmatpush1.xpose.msra.mxu0 0.0
      %631 = vmatprep.subr.mxu0 0.0
      %632 = vmatpush1.xpose.msra.mxu0 0.0
      %633 = vmatprep.subr.mxu0 0.0
      %634 = vmatpush1.xpose.msra.mxu0 0.0
      %635 = vmatprep.subr.mxu0 0.0
      %636 = vmatpush1.xpose.msra.mxu0 0.0
      %637 = vmatprep.subr.mxu0 0.0
      %638 = vmatpush1.xpose.msra.mxu0 0.0
      %639 = vmatprep.subr.mxu0 0.0
      %640 = vmatpush1.xpose.msra.mxu0 0.0
      %641 = vmatprep.subr.mxu0 0.0
      %642 = vmatpush1.xpose.msra.mxu0 0.0
      %643 = vmatprep.subr.mxu0 0.0
      %644 = vmatpush1.xpose.msra.mxu0 0.0
      %645 = vmatprep.subr.mxu0 0.0
      %646 = vmatpush1.xpose.msra.mxu0 0.0
      %647 = vmatprep.subr.mxu0 0.0
      %648 = vmatpush1.xpose.msra.mxu0 0.0
      %649 = vmatprep.subr.mxu0 0.0
      %650 = vmatpush1.xpose.msra.mxu0 0.0
      %651 = vmatprep.subr.mxu0 0.0
      %652 = vmatpush1.xpose.msra.mxu0 0.0
      %653 = vmatprep.subr.mxu0 0.0
      %654 = vmatpush1.xpose.msra.mxu0 0.0
      %655 = vmatprep.subr.mxu0 0.0
      %656 = vmatpush1.xpose.msra.mxu0 0.0
      %657 = vmatprep.subr.mxu0 0.0
      %658 = vmatpush1.xpose.msra.mxu0 0.0
      %659 = vmatprep.subr.mxu0 0.0
      %660 = vmatpush1.xpose.msra.mxu0 0.0
      %661 = vmatprep.subr.mxu0 0.0
      %662 = vmatpush1.xpose.msra.mxu0 0.0
      %663 = vmatprep.subr.mxu0 0.0
      %664 = vmatpush1.xpose.msra.mxu0 0.0
      %665 = vmatprep.subr.mxu0 0.0
      %666 = vmatpush1.xpose.msra.mxu0 0.0
      %667 = vmatprep.subr.mxu0 0.0
      %668 = vmatpush1.xpose.msra.mxu0 0.0
      %669 = vmatprep.subr.mxu0 0.0
      %670 = vmatpush1.xpose.msra.mxu0 0.0
      %671 = vmatprep.subr.mxu0 0.0
      %672 = vmatpush1.xpose.msra.mxu0 0.0
      %673 = vmatprep.subr.mxu0 0.0
      %674 = vmatpush1.xpose.msra.mxu0 0.0
      %675 = vmatprep.subr.mxu0 0.0
      %676 = vmatpush1.xpose.msra.mxu0 0.0
      %677 = vmatprep.subr.mxu0 0.0
      %678 = vmatpush1.xpose.msra.mxu0 0.0
      %679 = vmatprep.subr.mxu0 0.0
      %680 = vmatpush1.xpose.msra.mxu0 0.0
      %681 = vmatprep.subr.mxu0 0.0
      %682 = vmatpush1.xpose.msra.mxu0 0.0
      %683 = vmatprep.mubr.f32.mxu0 0.0
      %684 = vmatmul.mubr.f32.gmra.mrb[0].mxu0 %v615
      %v685 = vpop.f32.mrb[0].mxu0
      %v686 = vadd.f32 0.0, %v685
      %v687 = vpop.f32.mrb[0].mxu0
      %688 = vdwg.mxu0
      %v689 = vmul.f32 %v686, 0.35355338
      %v690 = vsel %vm116, %v689, -inf
      %691 = vmax.xlane.f32.xlu0 %v690
      %v692 = vpop.xlane.xlu0 %691
      %v693 = vsub.f32 %v689, %v692
      %v694 = vmul.f32 %v693, 1.442695
      %v695 = vpow.pop %v694
      %v696 = vsel %vm116, %v695, 0.0
      %697 = vadd.xlane.f32.xlu0 %v696
      %v698 = vpop.xlane.xlu0 %697
      %v699 = vrcp.pop %v698
      %v700 = vmul.f32 %v695, %v699
      %701 = vrot.lane.b32.xlu0 %v112, 40
      %v702 = vpop.permute.xlu0 %701
      %v705 = vsel %vm116, %v700, 0
      %707 = vmatprep.subr.mxu0 0.0
      %708 = vmatpush1.msra.mxu0 %v702
      %709 = vmatprep.subr.mxu0 0.0
      %710 = vmatpush1.msra.mxu0 0.0
      %711 = vmatprep.subr.mxu0 0.0
      %712 = vmatpush1.msra.mxu0 0.0
      %713 = vmatprep.subr.mxu0 0.0
      %714 = vmatpush1.msra.mxu0 0.0
      %715 = vmatprep.subr.mxu0 0.0
      %716 = vmatpush1.msra.mxu0 0.0
      %717 = vmatprep.subr.mxu0 0.0
      %718 = vmatpush1.msra.mxu0 0.0
      %719 = vmatprep.subr.mxu0 0.0
      %720 = vmatpush1.msra.mxu0 0.0
      %721 = vmatprep.subr.mxu0 0.0
      %722 = vmatpush1.msra.mxu0 0.0
      %723 = vmatprep.subr.mxu0 0.0
      %724 = vmatpush1.msra.mxu0 0.0
      %725 = vmatprep.subr.mxu0 0.0
      %726 = vmatpush1.msra.mxu0 0.0
      %727 = vmatprep.subr.mxu0 0.0
      %728 = vmatpush1.msra.mxu0 0.0
      %729 = vmatprep.subr.mxu0 0.0
      %730 = vmatpush1.msra.mxu0 0.0
      %731 = vmatprep.subr.mxu0 0.0
      %732 = vmatpush1.msra.mxu0 0.0
      %733 = vmatprep.subr.mxu0 0.0
      %734 = vmatpush1.msra.mxu0 0.0
      %735 = vmatprep.subr.mxu0 0.0
      %736 = vmatpush1.msra.mxu0 0.0
      %737 = vmatprep.subr.mxu0 0.0
      %738 = vmatpush1.msra.mxu0 0.0
      %739 = vmatprep.subr.mxu0 0.0
      %740 = vmatpush1.msra.mxu0 0.0
      %741 = vmatprep.subr.mxu0 0.0
      %742 = vmatpush1.msra.mxu0 0.0
      %743 = vmatprep.subr.mxu0 0.0
      %744 = vmatpush1.msra.mxu0 0.0
      %745 = vmatprep.subr.mxu0 0.0
      %746 = vmatpush1.msra.mxu0 0.0
      %747 = vmatprep.subr.mxu0 0.0
      %748 = vmatpush1.msra.mxu0 0.0
      %749 = vmatprep.subr.mxu0 0.0
      %750 = vmatpush1.msra.mxu0 0.0
      %751 = vmatprep.subr.mxu0 0.0
      %752 = vmatpush1.msra.mxu0 0.0
      %753 = vmatprep.subr.mxu0 0.0
      %754 = vmatpush1.msra.mxu0 0.0
      %755 = vmatprep.subr.mxu0 0.0
      %756 = vmatpush1.msra.mxu0 0.0
      %757 = vmatprep.subr.mxu0 0.0
      %758 = vmatpush1.msra.mxu0 0.0
      %759 = vmatprep.subr.mxu0 0.0
      %760 = vmatpush1.msra.mxu0 0.0
      %761 = vmatprep.subr.mxu0 0.0
      %762 = vmatpush1.msra.mxu0 0.0
      %763 = vmatprep.subr.mxu0 0.0
      %764 = vmatpush1.msra.mxu0 0.0
      %765 = vmatprep.subr.mxu0 0.0
      %766 = vmatpush1.msra.mxu0 0.0
      %767 = vmatprep.subr.mxu0 0.0
      %768 = vmatpush1.msra.mxu0 0.0
      %769 = vmatprep.subr.mxu0 0.0
      %770 = vmatpush1.msra.mxu0 0.0
      %771 = vmatprep.mubr.f32.mxu0 0.0
      %772 = vmatmul.mubr.f32.gmra.mrb[0].mxu0 %v705
      %v773 = vpop.f32.mrb[0].mxu0
      %v774 = vadd.f32 0.0, %v773
      %v775 = vpop.f32.mrb[0].mxu0
      %776 = vdwg.mxu0
      %778 = vrot.lane.b32.xlu0 %v442, 8
      %v779 = vpop.permute.xlu0 %778
      %782 = vrot.lane.b32.xlu0 %v608, 16
      %v783 = vpop.permute.xlu0 %782
      %786 = vrot.lane.b32.xlu0 %v774, 24
      %v787 = vpop.permute.xlu0 %786
      %v789 = vsel %vm116, %v276, %v779
      %vm790 = vcmask 130048
      %v791 = vsel %vm790, %v789, %v783
      %vm792 = vcmask 195584
      %v793 = vsel %vm792, %v791, %v787
      %vm794 = vcmask 261120
      %795 = vst.msk [vmem:[%s111] sm:$0xff] %vm794, %v793
      %p796 = scmp.lt.s32.totalorder %s12, 1
      %s797 = scalar_select %p796, %s12, 1
      %s798 = smul.addr %s797, 8
      %s799 = scalar_lea.vmem %s1, %s798
      // Predicated region
      $region25: #{block_forward.6} parent=23 // pred_check
        %p800 = pneg %p56
      $region26: #{block_forward.6} parent=23 // pred_check_branch
        %802 = sbr.rel (%p800) target = $region28
      $region27: #{block_forward.6} parent=23 // pred_region
        _
      $region28: #{block_forward.6} parent=23 // pred_fallthru
        _
    $region24: #{block_forward.6} parent=5 // pred_fallthru
      _
    %p803 = scmp.le.s32.totalorder 2, %s7
    // Predicated region
    $region29: #{block_forward.6} parent=5 // pred_check
      %p804 = pneg %p803
    $region30: #{block_forward.6} parent=5 // pred_check_branch
      %806 = sbr.rel (%p804) target = $region32
    $region31: #{block_forward.6} parent=5 // pred_region
      %s807 = ssub.s32 %s7, 2
      // Predicated region
      $region33: #{block_forward.6} parent=31 // pred_check
        %p808 = pneg %p62
      $region34: #{block_forward.6} parent=31 // pred_check_branch
        %810 = sbr.rel (%p808) target = $region36
      $region35: #{block_forward.6} parent=31 // pred_region
        %p811 = scmp.lt.s32.totalorder %s13, 1
        %s812 = scalar_select %p811, %s13, 1
        %s813 = smul.addr %s812, 8
        %s814 = scalar_lea.vmem %s1, %s813
      $region36: #{block_forward.6} parent=31 // pred_fallthru
        _
    $region32: #{block_forward.6} parent=5 // pred_fallthru
      _
  $region6: #{block_forward.6} parent=0 // loop_footer
    %s11 = sadd.s32 1, %s7
  $region7: #{block_forward.6} parent=0 // loop_footer_branch
    %6 = sbr.rel target = $region3
  $region8: #{block_forward.6} parent=0 // loop_exit
    _

// kernel: block_forward.9
$region0: #{block_forward.9}
  #allocation0 [shape = 'u32[]', space=smem, size = 0x4, offset = 0x4, fixed_abs, tag = 'smem constant byte address 0x4 - core index']
  #allocation1 [shape = 'u32[144,128]{1,0:T(1,128)}', space=vmem, size = 0x12000, scoped, tag = 'internal scratch']
  %s0 = inlined_call_operand.vmem [shape: f32[16,128], index: 0, kind: input, shape index: {}]
  %s1 = inlined_call_operand.vmem [shape: f32[128,32], index: 1, kind: input, shape index: {}]
  %s2 = inlined_call_operand.vmem [shape: f32[1,32], index: 2, kind: input, shape index: {}]
  %s3 = inlined_call_operand.vmem [shape: f32[16,32], index: 3, kind: input, shape index: {}]
  %s4 = inlined_call_operand.hbm [shape: f32[16,32], index: 4, kind: output, shape index: {}]
  %s5 = sld [smem:[#allocation0]]
  $region26: #{block_forward.9} parent=0
    _
  %s7 = ssub.s32 1, %s5
  %s8 = scalar_select 0, %s7, %s5
  $region1: #{block_forward.9} parent=0
    #allocation2 [shape = 'u8[8192]{0}', space=vmem, size = 0x2000, scoped, tag = 'output window, operand 0, single buffered']
    #allocation3 [shape = 's32[1]{0}', space=sflag, size = 0x4, scoped, tag = 'scoped memory for block_forward.9']
    %9 = vsyncpa [#allocation3], 0
    // Predicated region
    $region2: #{block_forward.9} parent=1 // pred_check
      _
    $region3: #{block_forward.9} parent=1 // pred_check_branch
      %11 = sbr.rel (0) target = $region5
    $region4: #{block_forward.9} parent=1 // pred_region
      _
    $region5: #{block_forward.9} parent=1 // pred_fallthru
      _
    // Predicated region
    $region6: #{block_forward.9} parent=1 // pred_check
      _
    $region7: #{block_forward.9} parent=1 // pred_check_branch
      %13 = sbr.rel (0) target = $region9
    $region8: #{block_forward.9} parent=1 // pred_region
      _
    $region9: #{block_forward.9} parent=1 // pred_fallthru
      _
    // Predicated region
    $region10: #{block_forward.9} parent=1 // pred_check
      _
    $region11: #{block_forward.9} parent=1 // pred_check_branch
      %15 = sbr.rel (0) target = $region13
    $region12: #{block_forward.9} parent=1 // pred_region
      _
    $region13: #{block_forward.9} parent=1 // pred_fallthru
      _
    // Predicated region
    $region14: #{block_forward.9} parent=1 // pred_check
      _
    $region15: #{block_forward.9} parent=1 // pred_check_branch
      %17 = sbr.rel (0) target = $region17
    $region16: #{block_forward.9} parent=1 // pred_region
      _
    $region17: #{block_forward.9} parent=1 // pred_fallthru
      _
    %v18 = vld [vmem:[%s0] sm:$0xff]
    %v19 = vld [vmem:[%s0 + $0x8] sm:$0xff]
    %v20 = vld [vmem:[%s1] sm:$0xff]
    %v21 = vld [vmem:[%s1 + $0x8] sm:$0xff]
    %v22 = vld [vmem:[%s1 + $0x10] sm:$0xff]
    %v23 = vld [vmem:[%s1 + $0x18] sm:$0xff]
    %v24 = vld [vmem:[%s1 + $0x20] sm:$0xff]
    %v25 = vld [vmem:[%s1 + $0x28] sm:$0xff]
    %v26 = vld [vmem:[%s1 + $0x30] sm:$0xff]
    %v27 = vld [vmem:[%s1 + $0x38] sm:$0xff]
    %v28 = vld [vmem:[%s1 + $0x40] sm:$0xff]
    %v29 = vld [vmem:[%s1 + $0x48] sm:$0xff]
    %v30 = vld [vmem:[%s1 + $0x50] sm:$0xff]
    %v31 = vld [vmem:[%s1 + $0x58] sm:$0xff]
    %v32 = vld [vmem:[%s1 + $0x60] sm:$0xff]
    %v33 = vld [vmem:[%s1 + $0x68] sm:$0xff]
    %v34 = vld [vmem:[%s1 + $0x70] sm:$0xff]
    %v35 = vld [vmem:[%s1 + $0x78] sm:$0xff]
    %v36 = vld [vmem:[%s2] sm:$0x1]
    %v38 = vlaneseq
    %v39 = vshrl.u32 %v38, 7
    %v40 = vsub.s32 0, %v39
    %v41 = vrot.slane %v36, %v40
    %43 = vmatprep.subr.mxu0 0.0
    %44 = vmatpush1.msra.mxu0 %v20
    %45 = vmatprep.subr.mxu0 0.0
    %46 = vmatpush1.msra.mxu0 %v21
    %47 = vmatprep.subr.mxu0 0.0
    %48 = vmatpush1.msra.mxu0 %v22
    %49 = vmatprep.subr.mxu0 0.0
    %50 = vmatpush1.msra.mxu0 %v23
    %51 = vmatprep.subr.mxu0 0.0
    %52 = vmatpush1.msra.mxu0 %v24
    %53 = vmatprep.subr.mxu0 0.0
    %54 = vmatpush1.msra.mxu0 %v25
    %55 = vmatprep.subr.mxu0 0.0
    %56 = vmatpush1.msra.mxu0 %v26
    %57 = vmatprep.subr.mxu0 0.0
    %58 = vmatpush1.msra.mxu0 %v27
    %59 = vmatprep.subr.mxu0 0.0
    %60 = vmatpush1.msra.mxu0 %v28
    %61 = vmatprep.subr.mxu0 0.0
    %62 = vmatpush1.msra.mxu0 %v29
    %63 = vmatprep.subr.mxu0 0.0
    %64 = vmatpush1.msra.mxu0 %v30
    %65 = vmatprep.subr.mxu0 0.0
    %66 = vmatpush1.msra.mxu0 %v31
    %67 = vmatprep.subr.mxu0 0.0
    %68 = vmatpush1.msra.mxu0 %v32
    %69 = vmatprep.subr.mxu0 0.0
    %70 = vmatpush1.msra.mxu0 %v33
    %71 = vmatprep.subr.mxu0 0.0
    %72 = vmatpush1.msra.mxu0 %v34
    %73 = vmatprep.subr.mxu0 0.0
    %74 = vmatpush1.msra.mxu0 %v35
    %75 = vmatprep.subr.mxu0 0.0
    %76 = vmatpush1.msra.mxu0 0.0
    %77 = vmatprep.subr.mxu0 0.0
    %78 = vmatpush1.msra.mxu0 0.0
    %79 = vmatprep.subr.mxu0 0.0
    %80 = vmatpush1.msra.mxu0 0.0
    %81 = vmatprep.subr.mxu0 0.0
    %82 = vmatpush1.msra.mxu0 0.0
    %83 = vmatprep.subr.mxu0 0.0
    %84 = vmatpush1.msra.mxu0 0.0
    %85 = vmatprep.subr.mxu0 0.0
    %86 = vmatpush1.msra.mxu0 0.0
    %87 = vmatprep.subr.mxu0 0.0
    %88 = vmatpush1.msra.mxu0 0.0
    %89 = vmatprep.subr.mxu0 0.0
    %90 = vmatpush1.msra.mxu0 0.0
    %91 = vmatprep.subr.mxu0 0.0
    %92 = vmatpush1.msra.mxu0 0.0
    %93 = vmatprep.subr.mxu0 0.0
    %94 = vmatpush1.msra.mxu0 0.0
    %95 = vmatprep.subr.mxu0 0.0
    %96 = vmatpush1.msra.mxu0 0.0
    %97 = vmatprep.subr.mxu0 0.0
    %98 = vmatpush1.msra.mxu0 0.0
    %99 = vmatprep.subr.mxu0 0.0
    %100 = vmatpush1.msra.mxu0 0.0
    %101 = vmatprep.subr.mxu0 0.0
    %102 = vmatpush1.msra.mxu0 0.0
    %103 = vmatprep.subr.mxu0 0.0
    %104 = vmatpush1.msra.mxu0 0.0
    %105 = vmatprep.subr.mxu0 0.0
    %106 = vmatpush1.msra.mxu0 0.0
    %107 = vmatprep.mubr.f32.mxu0 0.0
    %108 = vmatmul.mubr.f32.gmra.mrb[0].mxu0 %v18
    %v109 = vpop.f32.mrb[0].mxu0
    %v110 = vadd.f32 %v41, %v109
    %v111 = vpop.f32.mrb[0].mxu0
    %112 = vmatprep.mubr.f32.mxu0 0.0
    %113 = vmatmul.mubr.f32.gmra.mrb[0].mxu0 %v19
    %v114 = vpop.f32.mrb[0].mxu0
    %v115 = vadd.f32 %v41, %v114
    %v116 = vpop.f32.mrb[0].mxu0
    %117 = vdwg.mxu0
    %v118 = vld [vmem:[%s3] sm:$0xff]
    %v119 = vld [vmem:[%s3 + $0x8] sm:$0xff]
    %v120 = vadd.f32 %v110, %v118
    %v121 = vadd.f32 %v115, %v119
    %vm122 = vcmask 261120
    %123 = vst.msk [vmem:[#allocation2] sm:$0xff] %vm122, %v120
    %124 = vst.msk [vmem:[#allocation2 + $0x8] sm:$0xff] %vm122, %v121
    // Predicated region
    $region18: #{block_forward.9} parent=1 // pred_check
      _
    $region19: #{block_forward.9} parent=1 // pred_check_branch
      %126 = sbr.rel (0) target = $region21
    $region20: #{block_forward.9} parent=1 // pred_region
      %s128 = ssub.s32 256, 256
      %129 = vsyncadd [#allocation3], %s128
      %s130 = sshll.u32 [#allocation2], 4
      %s131 = int_to_ptr.vmem [resolvable:$true] %s130
      %136 = dma.vmem_to_hbm [thread:$0]  %s131, 256, %s4, [#allocation3], 128, 128, 8
    $region21: #{block_forward.9} parent=1 // pred_fallthru
      _
    // Predicated region
    $region22: #{block_forward.9} parent=1 // pred_check
      _
    $region23: #{block_forward.9} parent=1 // pred_check_branch
      %138 = sbr.rel (0) target = $region25
    $region24: #{block_forward.9} parent=1 // pred_region
      %139 = dma.done [#allocation3], 256
    $region25: #{block_forward.9} parent=1 // pred_fallthru
      _
    %140 = vsyncpa [#allocation3], 1

</llo_original>
